<compile_context>
chip_gen: v7x
topology: tpu7x:2x2x1
jax: 0.10.0
libtpu: 0.0.40
codegen_flags: <defaults>
</compile_context>

<pallas_src>
import math

import jax
import jax.numpy as jnp
from jax import lax
from jax.experimental import pallas as pl
from jax.experimental.pallas import tpu as pltpu


def _channel_softmax(s):
    """Softmax over axis 0 of a stacked (c, w, w) score tensor."""
    m = jnp.max(s, axis=0, keepdims=True)
    e = jnp.exp(s - m)
    den = jnp.sum(e, axis=0, keepdims=True)           # >= 1 (max subtracted)
    inv = pl.reciprocal(den, approx=True)              # EUP slot (nearly free)
    inv = inv * (2.0 - den * inv)                      # one Newton step -> ~f32
    return e * inv


def _mcam_kernel(opt_ref, sar_ref, w_opt_ref, w_sar_ref, eye_ref, out_ref):
    """Per-grid-step MCAM on natural NCHW blocks.

    opt_ref / sar_ref : (bt, c, h, w)  VMEM, natural NCHW
    w_opt_ref/w_sar_ref: (c, c)        SMEM (scalar reads)
    eye_ref           : (c, w, w)      VMEM, c copies of I_w (MXU transpose)
    out_ref           : (bt, c, h, w)  VMEM, natural NCHW
    """
    bt, c, h, w = opt_ref.shape

    # Weights: c*c scalars, read once per grid step from SMEM.
    w_opt_s = [[w_opt_ref[o, i] for i in range(c)] for o in range(c)]
    w_sar_s = [[w_sar_ref[o, i] for i in range(c)] for o in range(c)]
    eye_b = eye_ref[...]                                # (c, w, w), hoisted

    def conv1x1(x, w_s):
        # x: (c, h, w).  1x1 conv == channel mix; done as c^2 scalar*tile MACs
        # on the VPU (cheap at small c, no reshapes, results stay in vregs).
        outs = []
        for o in range(c):
            acc = x[0] * w_s[o][0]
            for i in range(1, c):
                acc = acc + x[i] * w_s[o][i]
            outs.append(acc)
        return jnp.stack(outs, axis=0)                  # (c, h, w)

    def per_image(bi, carry):
        v_opt = conv1x1(opt_ref[bi], w_opt_s)           # (c, h, w) natural
        v_sar = conv1x1(sar_ref[bi], w_sar_s)

        # MXU "transpose": vT[ch, i, y] = v[ch, y, i], via a batched NT matmul
        # with the identity (avoids relying on minor-dim transposes or
        # transposed-LHS dot_generals for 16-wide tiles).
        vt_opt = jnp.einsum('cix,chx->cih', eye_b, v_opt,
                            preferred_element_type=jnp.float32)   # (c, w, h)
        vt_sar = jnp.einsum('cix,chx->cih', eye_b, v_sar,
                            preferred_element_type=jnp.float32)

        # Column Gram per channel, batched on the MXU:
        #   s[ch, i, j] = sum_y v[ch, y, i] * v[ch, y, j]   (== Q^T K)
        s_opt = jnp.einsum('ciy,cjy->cij', vt_opt, vt_opt,
                           preferred_element_type=jnp.float32)    # (c, w, w)
        s_sar = jnp.einsum('ciy,cjy->cij', vt_sar, vt_sar,
                           preferred_element_type=jnp.float32)

        # Channel softmax (PyTorch nn.Softmax() default dim=1), then combine.
        had = _channel_softmax(s_opt) * _channel_softmax(s_sar)   # (c, w, w)

        # Att = (V_opt * had) * (V_sar * had): pure elementwise (h == w),
        # already in natural NCHW orientation -> store directly.
        att = (v_opt * had) * (v_sar * had)             # (c, h, w)
        out_ref[bi] = att.astype(out_ref.dtype)
        return carry

    lax.fori_loop(0, bt, per_image, 0, unroll=True)


def mcam_forward(opt, sar, w_opt, w_sar, *, batch_block=1):
    """opt, sar: (b, c, h, w) float32; w_opt, w_sar: (c, c) float32.

    batch_block: images per grid step.  Keep >= 2 grid steps on v7x (batch axis
    is 'parallel' so both TensorCores get work); fatten freely on v5e/v6e to
    amortise per-step overhead -- the per-step VMEM footprint is tiny.
    """
    b, c, h, w = opt.shape
    assert h == w, "MCAM broadcasting requires square spatial dims (h == w)"
    assert sar.shape == opt.shape
    assert w_opt.shape == (c, c) and w_sar.shape == (c, c)
    assert b % batch_block == 0
    bt = batch_block

    # c stacked copies of I_w: used as the LHS of a batched NT matmul inside
    # the kernel to form V^T on the MXU (tiny: c*w*w*4 bytes).
    eye_b = jnp.broadcast_to(jnp.eye(w, dtype=jnp.float32), (c, w, w))

    x_spec = pl.BlockSpec((bt, c, h, w), lambda i: (i, 0, 0, 0))
    w_spec = pl.BlockSpec(memory_space=pltpu.MemorySpace.SMEM)
    eye_spec = pl.BlockSpec((c, w, w), lambda i: (0, 0, 0))
    out_spec = pl.BlockSpec((bt, c, h, w), lambda i: (i, 0, 0, 0))

    return pl.pallas_call(
        _mcam_kernel,
        out_shape=jax.ShapeDtypeStruct((b, c, h, w), opt.dtype),
        grid=(b // bt,),
        in_specs=[x_spec, x_spec, w_spec, w_spec, eye_spec],
        out_specs=out_spec,
        compiler_params=pltpu.CompilerParams(
            dimension_semantics=("parallel",)),
    )(opt, sar, w_opt.astype(jnp.float32), w_sar.astype(jnp.float32), eye_b)


def _mcam_reference(opt, sar, w_opt, w_sar):
    """Pure-JAX reference of the PyTorch forward (f32-accurate matmuls)."""
    hp = jax.lax.Precision.HIGHEST
    v_opt = jnp.einsum("oi,bihw->bohw", w_opt, opt, precision=hp)
    v_sar = jnp.einsum("oi,bihw->bohw", w_sar, sar, precision=hp)
    s_opt = jax.nn.softmax(
        jnp.einsum("bchi,bchj->bcij", v_opt, v_opt, precision=hp), axis=1)
    s_sar = jax.nn.softmax(
        jnp.einsum("bchi,bchj->bcij", v_sar, v_sar, precision=hp), axis=1)
    had = s_opt * s_sar
    return (v_opt * had) * (v_sar * had)


if __name__ == "__main__":
    b, c, h, w = 2, 4, 16, 16

    key = jax.random.PRNGKey(0)
    k1, k2, k3, k4 = jax.random.split(key, 4)

    opt = jax.random.normal(k1, (b, c, h, w), dtype=jnp.float32)
    sar = jax.random.normal(k2, (b, c, h, w), dtype=jnp.float32)

    # kaiming_normal-style init for the 1x1 convs: std = sqrt(2 / fan_in).
    std = math.sqrt(2.0 / c)
    w_opt = std * jax.random.normal(k3, (c, c), dtype=jnp.float32)
    w_sar = std * jax.random.normal(k4, (c, c), dtype=jnp.float32)

    expected = _mcam_reference(opt, sar, w_opt, w_sar)

    # one image per grid step: >=2 'parallel' steps (v7x two-TC path)
    out = jax.block_until_ready(mcam_forward(opt, sar, w_opt, w_sar))
    assert out.shape == (b, c, h, w)
    err = float(jnp.max(jnp.abs(out - expected)))
    assert jnp.allclose(out, expected, rtol=1e-4, atol=1e-4), (
        "max abs err = %g" % err)

    # fattened grid: whole batch in a single invocation (v5e/v6e path)
    out2 = jax.block_until_ready(
        mcam_forward(opt, sar, w_opt, w_sar, batch_block=b))
    err2 = float(jnp.max(jnp.abs(out2 - expected)))
    assert jnp.allclose(out2, expected, rtol=1e-4, atol=1e-4), (
        "max abs err (batch_block=%d) = %g" % (b, err2))

    print("KERNEL_OK")
</pallas_src>

<mosaic_0001>
module attributes {stable_mosaic.version = 11 : i64} {
  func.func @_mcam_kernel(%arg0: i32, %arg1: memref<1x4x16x16xf32, #tpu.memory_space<vmem>>, %arg2: memref<1x4x16x16xf32, #tpu.memory_space<vmem>>, %arg3: memref<4x4xf32, #tpu.memory_space<smem>>, %arg4: memref<4x4xf32, #tpu.memory_space<smem>>, %arg5: memref<4x16x16xf32, #tpu.memory_space<vmem>>, %arg6: memref<1x4x16x16xf32, #tpu.memory_space<vmem>>) attributes {dimension_semantics = [#tpu.dimension_semantics<parallel>], iteration_bounds = array<i64: 2>, scalar_prefetch = 0 : i64, scratch_operands = 0 : i64, tpu.core_type = #tpu.core_type<tc>, window_params = [{transform_indices = @transform_0, window_bounds = array<i64: 1, 4, 16, 16>}, {transform_indices = @transform_1, window_bounds = array<i64: 1, 4, 16, 16>}, {transform_indices = @transform_2, window_bounds = array<i64: 4, 4>}, {transform_indices = @transform_3, window_bounds = array<i64: 4, 4>}, {pipeline_mode = #tpu.pipeline_mode<synchronous>, transform_indices = @transform_4, window_bounds = array<i64: 4, 16, 16>}, {transform_indices = @transform_5, window_bounds = array<i64: 1, 4, 16, 16>}]} {
    %c0 = arith.constant 0 : index
    %c0_0 = arith.constant 0 : index
    %0 = memref.load %arg3[%c0, %c0_0] : memref<4x4xf32, #tpu.memory_space<smem>>
    %c0_1 = arith.constant 0 : index
    %c1 = arith.constant 1 : index
    %1 = memref.load %arg3[%c0_1, %c1] : memref<4x4xf32, #tpu.memory_space<smem>>
    %c0_2 = arith.constant 0 : index
    %c2 = arith.constant 2 : index
    %2 = memref.load %arg3[%c0_2, %c2] : memref<4x4xf32, #tpu.memory_space<smem>>
    %c0_3 = arith.constant 0 : index
    %c3 = arith.constant 3 : index
    %3 = memref.load %arg3[%c0_3, %c3] : memref<4x4xf32, #tpu.memory_space<smem>>
    %c1_4 = arith.constant 1 : index
    %c0_5 = arith.constant 0 : index
    %4 = memref.load %arg3[%c1_4, %c0_5] : memref<4x4xf32, #tpu.memory_space<smem>>
    %c1_6 = arith.constant 1 : index
    %c1_7 = arith.constant 1 : index
    %5 = memref.load %arg3[%c1_6, %c1_7] : memref<4x4xf32, #tpu.memory_space<smem>>
    %c1_8 = arith.constant 1 : index
    %c2_9 = arith.constant 2 : index
    %6 = memref.load %arg3[%c1_8, %c2_9] : memref<4x4xf32, #tpu.memory_space<smem>>
    %c1_10 = arith.constant 1 : index
    %c3_11 = arith.constant 3 : index
    %7 = memref.load %arg3[%c1_10, %c3_11] : memref<4x4xf32, #tpu.memory_space<smem>>
    %c2_12 = arith.constant 2 : index
    %c0_13 = arith.constant 0 : index
    %8 = memref.load %arg3[%c2_12, %c0_13] : memref<4x4xf32, #tpu.memory_space<smem>>
    %c2_14 = arith.constant 2 : index
    %c1_15 = arith.constant 1 : index
    %9 = memref.load %arg3[%c2_14, %c1_15] : memref<4x4xf32, #tpu.memory_space<smem>>
    %c2_16 = arith.constant 2 : index
    %c2_17 = arith.constant 2 : index
    %10 = memref.load %arg3[%c2_16, %c2_17] : memref<4x4xf32, #tpu.memory_space<smem>>
    %c2_18 = arith.constant 2 : index
    %c3_19 = arith.constant 3 : index
    %11 = memref.load %arg3[%c2_18, %c3_19] : memref<4x4xf32, #tpu.memory_space<smem>>
    %c3_20 = arith.constant 3 : index
    %c0_21 = arith.constant 0 : index
    %12 = memref.load %arg3[%c3_20, %c0_21] : memref<4x4xf32, #tpu.memory_space<smem>>
    %c3_22 = arith.constant 3 : index
    %c1_23 = arith.constant 1 : index
    %13 = memref.load %arg3[%c3_22, %c1_23] : memref<4x4xf32, #tpu.memory_space<smem>>
    %c3_24 = arith.constant 3 : index
    %c2_25 = arith.constant 2 : index
    %14 = memref.load %arg3[%c3_24, %c2_25] : memref<4x4xf32, #tpu.memory_space<smem>>
    %c3_26 = arith.constant 3 : index
    %c3_27 = arith.constant 3 : index
    %15 = memref.load %arg3[%c3_26, %c3_27] : memref<4x4xf32, #tpu.memory_space<smem>>
    %c0_28 = arith.constant 0 : index
    %c0_29 = arith.constant 0 : index
    %16 = memref.load %arg4[%c0_28, %c0_29] : memref<4x4xf32, #tpu.memory_space<smem>>
    %c0_30 = arith.constant 0 : index
    %c1_31 = arith.constant 1 : index
    %17 = memref.load %arg4[%c0_30, %c1_31] : memref<4x4xf32, #tpu.memory_space<smem>>
    %c0_32 = arith.constant 0 : index
    %c2_33 = arith.constant 2 : index
    %18 = memref.load %arg4[%c0_32, %c2_33] : memref<4x4xf32, #tpu.memory_space<smem>>
    %c0_34 = arith.constant 0 : index
    %c3_35 = arith.constant 3 : index
    %19 = memref.load %arg4[%c0_34, %c3_35] : memref<4x4xf32, #tpu.memory_space<smem>>
    %c1_36 = arith.constant 1 : index
    %c0_37 = arith.constant 0 : index
    %20 = memref.load %arg4[%c1_36, %c0_37] : memref<4x4xf32, #tpu.memory_space<smem>>
    %c1_38 = arith.constant 1 : index
    %c1_39 = arith.constant 1 : index
    %21 = memref.load %arg4[%c1_38, %c1_39] : memref<4x4xf32, #tpu.memory_space<smem>>
    %c1_40 = arith.constant 1 : index
    %c2_41 = arith.constant 2 : index
    %22 = memref.load %arg4[%c1_40, %c2_41] : memref<4x4xf32, #tpu.memory_space<smem>>
    %c1_42 = arith.constant 1 : index
    %c3_43 = arith.constant 3 : index
    %23 = memref.load %arg4[%c1_42, %c3_43] : memref<4x4xf32, #tpu.memory_space<smem>>
    %c2_44 = arith.constant 2 : index
    %c0_45 = arith.constant 0 : index
    %24 = memref.load %arg4[%c2_44, %c0_45] : memref<4x4xf32, #tpu.memory_space<smem>>
    %c2_46 = arith.constant 2 : index
    %c1_47 = arith.constant 1 : index
    %25 = memref.load %arg4[%c2_46, %c1_47] : memref<4x4xf32, #tpu.memory_space<smem>>
    %c2_48 = arith.constant 2 : index
    %c2_49 = arith.constant 2 : index
    %26 = memref.load %arg4[%c2_48, %c2_49] : memref<4x4xf32, #tpu.memory_space<smem>>
    %c2_50 = arith.constant 2 : index
    %c3_51 = arith.constant 3 : index
    %27 = memref.load %arg4[%c2_50, %c3_51] : memref<4x4xf32, #tpu.memory_space<smem>>
    %c3_52 = arith.constant 3 : index
    %c0_53 = arith.constant 0 : index
    %28 = memref.load %arg4[%c3_52, %c0_53] : memref<4x4xf32, #tpu.memory_space<smem>>
    %c3_54 = arith.constant 3 : index
    %c1_55 = arith.constant 1 : index
    %29 = memref.load %arg4[%c3_54, %c1_55] : memref<4x4xf32, #tpu.memory_space<smem>>
    %c3_56 = arith.constant 3 : index
    %c2_57 = arith.constant 2 : index
    %30 = memref.load %arg4[%c3_56, %c2_57] : memref<4x4xf32, #tpu.memory_space<smem>>
    %c3_58 = arith.constant 3 : index
    %c3_59 = arith.constant 3 : index
    %31 = memref.load %arg4[%c3_58, %c3_59] : memref<4x4xf32, #tpu.memory_space<smem>>
    %c0_60 = arith.constant 0 : index
    %c0_61 = arith.constant 0 : index
    %c0_62 = arith.constant 0 : index
    %32 = vector.load %arg5[%c0_60, %c0_61, %c0_62] : memref<4x16x16xf32, #tpu.memory_space<vmem>>, vector<4x16x16xf32>
    %c0_i32 = arith.constant 0 : i32
    %33 = arith.index_cast %c0_i32 : i32 to index
    %c0_63 = arith.constant 0 : index
    %c0_64 = arith.constant 0 : index
    %c0_65 = arith.constant 0 : index
    %34 = vector.load %arg1[%33, %c0_63, %c0_64, %c0_65] : memref<1x4x16x16xf32, #tpu.memory_space<vmem>>, vector<1x4x16x16xf32>
    %35 = vector.shape_cast %34 : vector<1x4x16x16xf32> to vector<4x16x16xf32>
    %36 = vector.extract_strided_slice %35 {offsets = [0, 0, 0], sizes = [1, 16, 16], strides = [1, 1, 1]} : vector<4x16x16xf32> to vector<1x16x16xf32>
    %37 = vector.shape_cast %36 : vector<1x16x16xf32> to vector<16x16xf32>
    %38 = vector.broadcast %0 : f32 to vector<16x16xf32>
    %39 = arith.mulf %37, %38 : vector<16x16xf32>
    %40 = vector.extract_strided_slice %35 {offsets = [1, 0, 0], sizes = [1, 16, 16], strides = [1, 1, 1]} : vector<4x16x16xf32> to vector<1x16x16xf32>
    %41 = vector.shape_cast %40 : vector<1x16x16xf32> to vector<16x16xf32>
    %42 = vector.broadcast %1 : f32 to vector<16x16xf32>
    %43 = arith.mulf %41, %42 : vector<16x16xf32>
    %44 = arith.addf %39, %43 : vector<16x16xf32>
    %45 = vector.extract_strided_slice %35 {offsets = [2, 0, 0], sizes = [1, 16, 16], strides = [1, 1, 1]} : vector<4x16x16xf32> to vector<1x16x16xf32>
    %46 = vector.shape_cast %45 : vector<1x16x16xf32> to vector<16x16xf32>
    %47 = vector.broadcast %2 : f32 to vector<16x16xf32>
    %48 = arith.mulf %46, %47 : vector<16x16xf32>
    %49 = arith.addf %44, %48 : vector<16x16xf32>
    %50 = vector.extract_strided_slice %35 {offsets = [3, 0, 0], sizes = [1, 16, 16], strides = [1, 1, 1]} : vector<4x16x16xf32> to vector<1x16x16xf32>
    %51 = vector.shape_cast %50 : vector<1x16x16xf32> to vector<16x16xf32>
    %52 = vector.broadcast %3 : f32 to vector<16x16xf32>
    %53 = arith.mulf %51, %52 : vector<16x16xf32>
    %54 = arith.addf %49, %53 : vector<16x16xf32>
    %55 = vector.extract_strided_slice %35 {offsets = [0, 0, 0], sizes = [1, 16, 16], strides = [1, 1, 1]} : vector<4x16x16xf32> to vector<1x16x16xf32>
    %56 = vector.shape_cast %55 : vector<1x16x16xf32> to vector<16x16xf32>
    %57 = vector.broadcast %4 : f32 to vector<16x16xf32>
    %58 = arith.mulf %56, %57 : vector<16x16xf32>
    %59 = vector.extract_strided_slice %35 {offsets = [1, 0, 0], sizes = [1, 16, 16], strides = [1, 1, 1]} : vector<4x16x16xf32> to vector<1x16x16xf32>
    %60 = vector.shape_cast %59 : vector<1x16x16xf32> to vector<16x16xf32>
    %61 = vector.broadcast %5 : f32 to vector<16x16xf32>
    %62 = arith.mulf %60, %61 : vector<16x16xf32>
    %63 = arith.addf %58, %62 : vector<16x16xf32>
    %64 = vector.extract_strided_slice %35 {offsets = [2, 0, 0], sizes = [1, 16, 16], strides = [1, 1, 1]} : vector<4x16x16xf32> to vector<1x16x16xf32>
    %65 = vector.shape_cast %64 : vector<1x16x16xf32> to vector<16x16xf32>
    %66 = vector.broadcast %6 : f32 to vector<16x16xf32>
    %67 = arith.mulf %65, %66 : vector<16x16xf32>
    %68 = arith.addf %63, %67 : vector<16x16xf32>
    %69 = vector.extract_strided_slice %35 {offsets = [3, 0, 0], sizes = [1, 16, 16], strides = [1, 1, 1]} : vector<4x16x16xf32> to vector<1x16x16xf32>
    %70 = vector.shape_cast %69 : vector<1x16x16xf32> to vector<16x16xf32>
    %71 = vector.broadcast %7 : f32 to vector<16x16xf32>
    %72 = arith.mulf %70, %71 : vector<16x16xf32>
    %73 = arith.addf %68, %72 : vector<16x16xf32>
    %74 = vector.extract_strided_slice %35 {offsets = [0, 0, 0], sizes = [1, 16, 16], strides = [1, 1, 1]} : vector<4x16x16xf32> to vector<1x16x16xf32>
    %75 = vector.shape_cast %74 : vector<1x16x16xf32> to vector<16x16xf32>
    %76 = vector.broadcast %8 : f32 to vector<16x16xf32>
    %77 = arith.mulf %75, %76 : vector<16x16xf32>
    %78 = vector.extract_strided_slice %35 {offsets = [1, 0, 0], sizes = [1, 16, 16], strides = [1, 1, 1]} : vector<4x16x16xf32> to vector<1x16x16xf32>
    %79 = vector.shape_cast %78 : vector<1x16x16xf32> to vector<16x16xf32>
    %80 = vector.broadcast %9 : f32 to vector<16x16xf32>
    %81 = arith.mulf %79, %80 : vector<16x16xf32>
    %82 = arith.addf %77, %81 : vector<16x16xf32>
    %83 = vector.extract_strided_slice %35 {offsets = [2, 0, 0], sizes = [1, 16, 16], strides = [1, 1, 1]} : vector<4x16x16xf32> to vector<1x16x16xf32>
    %84 = vector.shape_cast %83 : vector<1x16x16xf32> to vector<16x16xf32>
    %85 = vector.broadcast %10 : f32 to vector<16x16xf32>
    %86 = arith.mulf %84, %85 : vector<16x16xf32>
    %87 = arith.addf %82, %86 : vector<16x16xf32>
    %88 = vector.extract_strided_slice %35 {offsets = [3, 0, 0], sizes = [1, 16, 16], strides = [1, 1, 1]} : vector<4x16x16xf32> to vector<1x16x16xf32>
    %89 = vector.shape_cast %88 : vector<1x16x16xf32> to vector<16x16xf32>
    %90 = vector.broadcast %11 : f32 to vector<16x16xf32>
    %91 = arith.mulf %89, %90 : vector<16x16xf32>
    %92 = arith.addf %87, %91 : vector<16x16xf32>
    %93 = vector.extract_strided_slice %35 {offsets = [0, 0, 0], sizes = [1, 16, 16], strides = [1, 1, 1]} : vector<4x16x16xf32> to vector<1x16x16xf32>
    %94 = vector.shape_cast %93 : vector<1x16x16xf32> to vector<16x16xf32>
    %95 = vector.broadcast %12 : f32 to vector<16x16xf32>
    %96 = arith.mulf %94, %95 : vector<16x16xf32>
    %97 = vector.extract_strided_slice %35 {offsets = [1, 0, 0], sizes = [1, 16, 16], strides = [1, 1, 1]} : vector<4x16x16xf32> to vector<1x16x16xf32>
    %98 = vector.shape_cast %97 : vector<1x16x16xf32> to vector<16x16xf32>
    %99 = vector.broadcast %13 : f32 to vector<16x16xf32>
    %100 = arith.mulf %98, %99 : vector<16x16xf32>
    %101 = arith.addf %96, %100 : vector<16x16xf32>
    %102 = vector.extract_strided_slice %35 {offsets = [2, 0, 0], sizes = [1, 16, 16], strides = [1, 1, 1]} : vector<4x16x16xf32> to vector<1x16x16xf32>
    %103 = vector.shape_cast %102 : vector<1x16x16xf32> to vector<16x16xf32>
    %104 = vector.broadcast %14 : f32 to vector<16x16xf32>
    %105 = arith.mulf %103, %104 : vector<16x16xf32>
    %106 = arith.addf %101, %105 : vector<16x16xf32>
    %107 = vector.extract_strided_slice %35 {offsets = [3, 0, 0], sizes = [1, 16, 16], strides = [1, 1, 1]} : vector<4x16x16xf32> to vector<1x16x16xf32>
    %108 = vector.shape_cast %107 : vector<1x16x16xf32> to vector<16x16xf32>
    %109 = vector.broadcast %15 : f32 to vector<16x16xf32>
    %110 = arith.mulf %108, %109 : vector<16x16xf32>
    %111 = arith.addf %106, %110 : vector<16x16xf32>
    %112 = vector.shape_cast %54 : vector<16x16xf32> to vector<1x16x16xf32>
    %113 = vector.shape_cast %73 : vector<16x16xf32> to vector<1x16x16xf32>
    %114 = vector.shape_cast %92 : vector<16x16xf32> to vector<1x16x16xf32>
    %115 = vector.shape_cast %111 : vector<16x16xf32> to vector<1x16x16xf32>
    %116 = tpu.concatenate %112, %113, %114, %115 in 0 : vector<1x16x16xf32>, vector<1x16x16xf32>, vector<1x16x16xf32>, vector<1x16x16xf32> -> vector<4x16x16xf32>
    %117 = arith.index_cast %c0_i32 : i32 to index
    %c0_66 = arith.constant 0 : index
    %c0_67 = arith.constant 0 : index
    %c0_68 = arith.constant 0 : index
    %118 = vector.load %arg2[%117, %c0_66, %c0_67, %c0_68] : memref<1x4x16x16xf32, #tpu.memory_space<vmem>>, vector<1x4x16x16xf32>
    %119 = vector.shape_cast %118 : vector<1x4x16x16xf32> to vector<4x16x16xf32>
    %120 = vector.extract_strided_slice %119 {offsets = [0, 0, 0], sizes = [1, 16, 16], strides = [1, 1, 1]} : vector<4x16x16xf32> to vector<1x16x16xf32>
    %121 = vector.shape_cast %120 : vector<1x16x16xf32> to vector<16x16xf32>
    %122 = vector.broadcast %16 : f32 to vector<16x16xf32>
    %123 = arith.mulf %121, %122 : vector<16x16xf32>
    %124 = vector.extract_strided_slice %119 {offsets = [1, 0, 0], sizes = [1, 16, 16], strides = [1, 1, 1]} : vector<4x16x16xf32> to vector<1x16x16xf32>
    %125 = vector.shape_cast %124 : vector<1x16x16xf32> to vector<16x16xf32>
    %126 = vector.broadcast %17 : f32 to vector<16x16xf32>
    %127 = arith.mulf %125, %126 : vector<16x16xf32>
    %128 = arith.addf %123, %127 : vector<16x16xf32>
    %129 = vector.extract_strided_slice %119 {offsets = [2, 0, 0], sizes = [1, 16, 16], strides = [1, 1, 1]} : vector<4x16x16xf32> to vector<1x16x16xf32>
    %130 = vector.shape_cast %129 : vector<1x16x16xf32> to vector<16x16xf32>
    %131 = vector.broadcast %18 : f32 to vector<16x16xf32>
    %132 = arith.mulf %130, %131 : vector<16x16xf32>
    %133 = arith.addf %128, %132 : vector<16x16xf32>
    %134 = vector.extract_strided_slice %119 {offsets = [3, 0, 0], sizes = [1, 16, 16], strides = [1, 1, 1]} : vector<4x16x16xf32> to vector<1x16x16xf32>
    %135 = vector.shape_cast %134 : vector<1x16x16xf32> to vector<16x16xf32>
    %136 = vector.broadcast %19 : f32 to vector<16x16xf32>
    %137 = arith.mulf %135, %136 : vector<16x16xf32>
    %138 = arith.addf %133, %137 : vector<16x16xf32>
    %139 = vector.extract_strided_slice %119 {offsets = [0, 0, 0], sizes = [1, 16, 16], strides = [1, 1, 1]} : vector<4x16x16xf32> to vector<1x16x16xf32>
    %140 = vector.shape_cast %139 : vector<1x16x16xf32> to vector<16x16xf32>
    %141 = vector.broadcast %20 : f32 to vector<16x16xf32>
    %142 = arith.mulf %140, %141 : vector<16x16xf32>
    %143 = vector.extract_strided_slice %119 {offsets = [1, 0, 0], sizes = [1, 16, 16], strides = [1, 1, 1]} : vector<4x16x16xf32> to vector<1x16x16xf32>
    %144 = vector.shape_cast %143 : vector<1x16x16xf32> to vector<16x16xf32>
    %145 = vector.broadcast %21 : f32 to vector<16x16xf32>
    %146 = arith.mulf %144, %145 : vector<16x16xf32>
    %147 = arith.addf %142, %146 : vector<16x16xf32>
    %148 = vector.extract_strided_slice %119 {offsets = [2, 0, 0], sizes = [1, 16, 16], strides = [1, 1, 1]} : vector<4x16x16xf32> to vector<1x16x16xf32>
    %149 = vector.shape_cast %148 : vector<1x16x16xf32> to vector<16x16xf32>
    %150 = vector.broadcast %22 : f32 to vector<16x16xf32>
    %151 = arith.mulf %149, %150 : vector<16x16xf32>
    %152 = arith.addf %147, %151 : vector<16x16xf32>
    %153 = vector.extract_strided_slice %119 {offsets = [3, 0, 0], sizes = [1, 16, 16], strides = [1, 1, 1]} : vector<4x16x16xf32> to vector<1x16x16xf32>
    %154 = vector.shape_cast %153 : vector<1x16x16xf32> to vector<16x16xf32>
    %155 = vector.broadcast %23 : f32 to vector<16x16xf32>
    %156 = arith.mulf %154, %155 : vector<16x16xf32>
    %157 = arith.addf %152, %156 : vector<16x16xf32>
    %158 = vector.extract_strided_slice %119 {offsets = [0, 0, 0], sizes = [1, 16, 16], strides = [1, 1, 1]} : vector<4x16x16xf32> to vector<1x16x16xf32>
    %159 = vector.shape_cast %158 : vector<1x16x16xf32> to vector<16x16xf32>
    %160 = vector.broadcast %24 : f32 to vector<16x16xf32>
    %161 = arith.mulf %159, %160 : vector<16x16xf32>
    %162 = vector.extract_strided_slice %119 {offsets = [1, 0, 0], sizes = [1, 16, 16], strides = [1, 1, 1]} : vector<4x16x16xf32> to vector<1x16x16xf32>
    %163 = vector.shape_cast %162 : vector<1x16x16xf32> to vector<16x16xf32>
    %164 = vector.broadcast %25 : f32 to vector<16x16xf32>
    %165 = arith.mulf %163, %164 : vector<16x16xf32>
    %166 = arith.addf %161, %165 : vector<16x16xf32>
    %167 = vector.extract_strided_slice %119 {offsets = [2, 0, 0], sizes = [1, 16, 16], strides = [1, 1, 1]} : vector<4x16x16xf32> to vector<1x16x16xf32>
    %168 = vector.shape_cast %167 : vector<1x16x16xf32> to vector<16x16xf32>
    %169 = vector.broadcast %26 : f32 to vector<16x16xf32>
    %170 = arith.mulf %168, %169 : vector<16x16xf32>
    %171 = arith.addf %166, %170 : vector<16x16xf32>
    %172 = vector.extract_strided_slice %119 {offsets = [3, 0, 0], sizes = [1, 16, 16], strides = [1, 1, 1]} : vector<4x16x16xf32> to vector<1x16x16xf32>
    %173 = vector.shape_cast %172 : vector<1x16x16xf32> to vector<16x16xf32>
    %174 = vector.broadcast %27 : f32 to vector<16x16xf32>
    %175 = arith.mulf %173, %174 : vector<16x16xf32>
    %176 = arith.addf %171, %175 : vector<16x16xf32>
    %177 = vector.extract_strided_slice %119 {offsets = [0, 0, 0], sizes = [1, 16, 16], strides = [1, 1, 1]} : vector<4x16x16xf32> to vector<1x16x16xf32>
    %178 = vector.shape_cast %177 : vector<1x16x16xf32> to vector<16x16xf32>
    %179 = vector.broadcast %28 : f32 to vector<16x16xf32>
    %180 = arith.mulf %178, %179 : vector<16x16xf32>
    %181 = vector.extract_strided_slice %119 {offsets = [1, 0, 0], sizes = [1, 16, 16], strides = [1, 1, 1]} : vector<4x16x16xf32> to vector<1x16x16xf32>
    %182 = vector.shape_cast %181 : vector<1x16x16xf32> to vector<16x16xf32>
    %183 = vector.broadcast %29 : f32 to vector<16x16xf32>
    %184 = arith.mulf %182, %183 : vector<16x16xf32>
    %185 = arith.addf %180, %184 : vector<16x16xf32>
    %186 = vector.extract_strided_slice %119 {offsets = [2, 0, 0], sizes = [1, 16, 16], strides = [1, 1, 1]} : vector<4x16x16xf32> to vector<1x16x16xf32>
    %187 = vector.shape_cast %186 : vector<1x16x16xf32> to vector<16x16xf32>
    %188 = vector.broadcast %30 : f32 to vector<16x16xf32>
    %189 = arith.mulf %187, %188 : vector<16x16xf32>
    %190 = arith.addf %185, %189 : vector<16x16xf32>
    %191 = vector.extract_strided_slice %119 {offsets = [3, 0, 0], sizes = [1, 16, 16], strides = [1, 1, 1]} : vector<4x16x16xf32> to vector<1x16x16xf32>
    %192 = vector.shape_cast %191 : vector<1x16x16xf32> to vector<16x16xf32>
    %193 = vector.broadcast %31 : f32 to vector<16x16xf32>
    %194 = arith.mulf %192, %193 : vector<16x16xf32>
    %195 = arith.addf %190, %194 : vector<16x16xf32>
    %196 = vector.shape_cast %138 : vector<16x16xf32> to vector<1x16x16xf32>
    %197 = vector.shape_cast %157 : vector<16x16xf32> to vector<1x16x16xf32>
    %198 = vector.shape_cast %176 : vector<16x16xf32> to vector<1x16x16xf32>
    %199 = vector.shape_cast %195 : vector<16x16xf32> to vector<1x16x16xf32>
    %200 = tpu.concatenate %196, %197, %198, %199 in 0 : vector<1x16x16xf32>, vector<1x16x16xf32>, vector<1x16x16xf32>, vector<1x16x16xf32> -> vector<4x16x16xf32>
    "tpu.trace_start"() <{level = 10 : i32, message = "cix,chx->cih"}> : () -> ()
    %cst = arith.constant dense<0.000000e+00> : vector<4x16x16xf32>
    %201 = tpu.matmul %32, %116, %cst {dimension_numbers = #tpu.dot_dimension_numbers<[2], [2], [1], [1], [0, 0, 0, 1, 1, 1], [0], [0]>} : vector<4x16x16xf32>, vector<4x16x16xf32>, vector<4x16x16xf32> -> vector<4x16x16xf32>
    %cst_69 = arith.constant dense<0.000000e+00> : vector<4x16x16xf32>
    %202 = tpu.matmul %32, %200, %cst_69 {dimension_numbers = #tpu.dot_dimension_numbers<[2], [2], [1], [1], [0, 0, 0, 1, 1, 1], [0], [0]>} : vector<4x16x16xf32>, vector<4x16x16xf32>, vector<4x16x16xf32> -> vector<4x16x16xf32>
    "tpu.trace_stop"() : () -> ()
    "tpu.trace_start"() <{level = 10 : i32, message = "ciy,cjy->cij"}> : () -> ()
    %cst_70 = arith.constant dense<0.000000e+00> : vector<4x16x16xf32>
    %203 = tpu.matmul %201, %201, %cst_70 {dimension_numbers = #tpu.dot_dimension_numbers<[2], [2], [1], [1], [0, 0, 0, 1, 1, 1], [0], [0]>} : vector<4x16x16xf32>, vector<4x16x16xf32>, vector<4x16x16xf32> -> vector<4x16x16xf32>
    %cst_71 = arith.constant dense<0.000000e+00> : vector<4x16x16xf32>
    %204 = tpu.matmul %202, %202, %cst_71 {dimension_numbers = #tpu.dot_dimension_numbers<[2], [2], [1], [1], [0, 0, 0, 1, 1, 1], [0], [0]>} : vector<4x16x16xf32>, vector<4x16x16xf32>, vector<4x16x16xf32> -> vector<4x16x16xf32>
    "tpu.trace_stop"() : () -> ()
    %cst_72 = arith.constant dense<0xFF800000> : vector<16x16xf32>
    %205 = vector.multi_reduction <maximumf>, %203, %cst_72 [0] : vector<4x16x16xf32> to vector<16x16xf32>
    %206 = vector.shape_cast %205 : vector<16x16xf32> to vector<1x16x16xf32>
    %207 = vector.broadcast %206 : vector<1x16x16xf32> to vector<4x16x16xf32>
    %208 = arith.subf %203, %207 : vector<4x16x16xf32>
    %209 = math.exp %208 : vector<4x16x16xf32>
    %cst_73 = arith.constant dense<0.000000e+00> : vector<16x16xf32>
    %210 = vector.multi_reduction <add>, %209, %cst_73 [0] : vector<4x16x16xf32> to vector<16x16xf32>
    %211 = vector.shape_cast %210 : vector<16x16xf32> to vector<1x16x16xf32>
    %212 = tpu.reciprocal %211 {approx = true} : vector<1x16x16xf32> -> vector<1x16x16xf32>
    %213 = arith.mulf %211, %212 : vector<1x16x16xf32>
    %cst_74 = arith.constant 2.000000e+00 : f32
    %214 = vector.broadcast %cst_74 : f32 to vector<1x16x16xf32>
    %215 = arith.subf %214, %213 : vector<1x16x16xf32>
    %216 = arith.mulf %212, %215 : vector<1x16x16xf32>
    %217 = vector.broadcast %216 : vector<1x16x16xf32> to vector<4x16x16xf32>
    %218 = arith.mulf %209, %217 : vector<4x16x16xf32>
    %cst_75 = arith.constant dense<0xFF800000> : vector<16x16xf32>
    %219 = vector.multi_reduction <maximumf>, %204, %cst_75 [0] : vector<4x16x16xf32> to vector<16x16xf32>
    %220 = vector.shape_cast %219 : vector<16x16xf32> to vector<1x16x16xf32>
    %221 = vector.broadcast %220 : vector<1x16x16xf32> to vector<4x16x16xf32>
    %222 = arith.subf %204, %221 : vector<4x16x16xf32>
    %223 = math.exp %222 : vector<4x16x16xf32>
    %cst_76 = arith.constant dense<0.000000e+00> : vector<16x16xf32>
    %224 = vector.multi_reduction <add>, %223, %cst_76 [0] : vector<4x16x16xf32> to vector<16x16xf32>
    %225 = vector.shape_cast %224 : vector<16x16xf32> to vector<1x16x16xf32>
    %226 = tpu.reciprocal %225 {approx = true} : vector<1x16x16xf32> -> vector<1x16x16xf32>
    %227 = arith.mulf %225, %226 : vector<1x16x16xf32>
    %cst_77 = arith.constant 2.000000e+00 : f32
    %228 = vector.broadcast %cst_77 : f32 to vector<1x16x16xf32>
    %229 = arith.subf %228, %227 : vector<1x16x16xf32>
    %230 = arith.mulf %226, %229 : vector<1x16x16xf32>
    %231 = vector.broadcast %230 : vector<1x16x16xf32> to vector<4x16x16xf32>
    %232 = arith.mulf %223, %231 : vector<4x16x16xf32>
    %233 = arith.mulf %218, %232 : vector<4x16x16xf32>
    %234 = arith.mulf %116, %233 : vector<4x16x16xf32>
    %235 = arith.mulf %200, %233 : vector<4x16x16xf32>
    %236 = arith.mulf %234, %235 : vector<4x16x16xf32>
    %237 = arith.index_cast %c0_i32 : i32 to index
    %c0_78 = arith.constant 0 : index
    %c0_79 = arith.constant 0 : index
    %c0_80 = arith.constant 0 : index
    %238 = vector.load %arg6[%237, %c0_78, %c0_79, %c0_80] : memref<1x4x16x16xf32, #tpu.memory_space<vmem>>, vector<1x4x16x16xf32>
    %239 = vector.shape_cast %238 : vector<1x4x16x16xf32> to vector<4x16x16xf32>
    %240 = vector.shape_cast %236 : vector<4x16x16xf32> to vector<1x4x16x16xf32>
    tpu.vector_store %arg6[%237, %c0_78, %c0_79, %c0_80], %240 {strides = array<i32>} : memref<1x4x16x16xf32, #tpu.memory_space<vmem>>, vector<1x4x16x16xf32>,
    %c1_i32 = arith.constant 1 : i32
    return
  }
  func.func @transform_0(%arg0: i32) -> (i32, i32, i32, i32) {
    %c0_i32 = arith.constant 0 : i32
    %c0_i32_0 = arith.constant 0 : i32
    %c0_i32_1 = arith.constant 0 : i32
    %c0_i32_2 = arith.constant 0 : i32
    return %arg0, %c0_i32, %c0_i32_0, %c0_i32_1 : i32, i32, i32, i32
  }
  func.func @transform_1(%arg0: i32) -> (i32, i32, i32, i32) {
    %c0_i32 = arith.constant 0 : i32
    %c0_i32_0 = arith.constant 0 : i32
    %c0_i32_1 = arith.constant 0 : i32
    %c0_i32_2 = arith.constant 0 : i32
    return %arg0, %c0_i32, %c0_i32_0, %c0_i32_1 : i32, i32, i32, i32
  }
  func.func @transform_2(%arg0: i32) -> (i32, i32) {
    %c0_i32 = arith.constant 0 : i32
    %c0_i32_0 = arith.constant 0 : i32
    %c0_i32_1 = arith.constant 0 : i32
    return %c0_i32, %c0_i32_0 : i32, i32
  }
  func.func @transform_3(%arg0: i32) -> (i32, i32) {
    %c0_i32 = arith.constant 0 : i32
    %c0_i32_0 = arith.constant 0 : i32
    %c0_i32_1 = arith.constant 0 : i32
    return %c0_i32, %c0_i32_0 : i32, i32
  }
  func.func @transform_4(%arg0: i32) -> (i32, i32, i32) {
    %c0_i32 = arith.constant 0 : i32
    %c0_i32_0 = arith.constant 0 : i32
    %c0_i32_1 = arith.constant 0 : i32
    %c0_i32_2 = arith.constant 0 : i32
    return %c0_i32, %c0_i32_0, %c0_i32_1 : i32, i32, i32
  }
  func.func @transform_5(%arg0: i32) -> (i32, i32, i32, i32) {
    %c0_i32 = arith.constant 0 : i32
    %c0_i32_0 = arith.constant 0 : i32
    %c0_i32_1 = arith.constant 0 : i32
    %c0_i32_2 = arith.constant 0 : i32
    return %arg0, %c0_i32, %c0_i32_0, %c0_i32_1 : i32, i32, i32, i32
  }
}

</mosaic_0001>

<llo_original>
// kernel: tpu_custom_call.1
$region0: #{tpu_custom_call.1}
  #allocation0 [shape = 'u32[]', space=smem, size = 0x4, offset = 0x4, fixed_abs, tag = 'smem constant byte address 0x4 - core index']
  #allocation1 [shape = 'u32[144,128]{1,0:T(1,128)}', space=vmem, size = 0x12000, scoped, tag = 'internal scratch']
  %s0 = inlined_call_operand.hbm [shape: f32[2,4,16,16], index: 0, kind: input, shape index: {}]
  %s1 = inlined_call_operand.hbm [shape: f32[2,4,16,16], index: 1, kind: input, shape index: {}]
  %s2 = inlined_call_operand.vmem [shape: f32[4,4], index: 2, kind: input, shape index: {}]
  %s3 = inlined_call_operand.vmem [shape: f32[4,4], index: 3, kind: input, shape index: {}]
  %s4 = inlined_call_operand.hbm [shape: f32[4,16,16], index: 4, kind: input, shape index: {}]
  %s5 = inlined_call_operand.hbm [shape: f32[2,4,16,16], index: 5, kind: output, shape index: {}]
  %s6 = sld [smem:[#allocation0]]
  $region73: #{tpu_custom_call.1} parent=0
    _
  %s8 = ssub.s32 1, %s6
  %s9 = scalar_select 0, %s8, %s6
  $region1: #{tpu_custom_call.1} parent=0
    #allocation2 [shape = 'u8[65536]{0}', space=vmem, size = 0x10000, scoped, tag = 'input window, operand 0']
    #allocation3 [shape = 's32[2]{0}', space=sflag, size = 0x8, scoped, tag = 'scoped memory for tpu_custom_call.1']
    #allocation4 [shape = 's32[2]{0}', space=sflag, size = 0x8, scoped, tag = 'scoped memory for tpu_custom_call.1']
    #allocation5 [shape = 's32[2]{0}', space=sflag, size = 0x8, scoped, tag = 'scoped memory for tpu_custom_call.1']
    #allocation6 [shape = 'u8[65536]{0}', space=vmem, size = 0x10000, scoped, tag = 'input window, operand 1']
    #allocation7 [shape = 's32[2]{0}', space=sflag, size = 0x8, scoped, tag = 'scoped memory for tpu_custom_call.1']
    #allocation8 [shape = 'u8[2048]{0}', space=smem, size = 0x800, scoped, tag = 'input window, operand 2, single buffered']
    #allocation9 [shape = 'u8[2048]{0}', space=smem, size = 0x800, scoped, tag = 'input window, operand 3, single buffered']
    #allocation10 [shape = 's32[1]{0}', space=sflag, size = 0x4, scoped, tag = 'scoped memory for tpu_custom_call.1']
    #allocation11 [shape = 'u8[32768]{0}', space=vmem, size = 0x8000, scoped, tag = 'input window, operand 4, single buffered']
    #allocation12 [shape = 'u8[65536]{0}', space=vmem, size = 0x10000, scoped, tag = 'output window, operand 0']
    %10 = vsyncpa [#allocation3], 0
    %s11 = scalar_lea.sflag [#allocation3], 1
    %12 = vsyncpa %s11, 0
    %13 = vsyncpa [#allocation7], 0
    %s14 = scalar_lea.sflag [#allocation7], 1
    %15 = vsyncpa %s14, 0
    %16 = vsyncpa [#allocation5], 0
    %17 = vsyncpa [#allocation10], 0
    %18 = vsyncpa [#allocation4], 0
    %s19 = scalar_lea.sflag [#allocation4], 1
    %20 = vsyncpa %s19, 0
    loop: start=0, step=1, limit=4
    $region2: #{tpu_custom_call.1} parent=1 // loop_pre_header
      _
    $region3: #{tpu_custom_call.1} parent=1 // loop_header
      %s22 = sphi 0, %s26
      %p23 = scmp.ge.s32.totalorder %s22, 4
      %s32 = sphi 0, %s34
      %s35 = sphi 0, %s32
      %s36 = sphi 0, %s35
      %s52 = sphi 0, %s36
      %s58 = sphi 0, %s60
      %s61 = sphi 0, %s58
      %s62 = sphi 0, %s61
      %s78 = sphi 0, %s62
      %s82 = sphi 0, %s82
      %s84 = sphi 0, %s82
      %s85 = sphi 0, %s84
      %s99 = sphi 0, %s85
      %s103 = sphi 0, %s103
      %s105 = sphi 0, %s103
      %s106 = sphi 0, %s105
      %s120 = sphi 0, %s106
      %s124 = sphi 0, %s124
      %s126 = sphi 0, %s124
      %s127 = sphi 0, %s126
      %s141 = sphi 0, %s127
      %s147 = sphi 0, %s149
      %s150 = sphi 0, %s147
      %s151 = sphi 0, %s150
      %s167 = sphi 0, %s151
    $region4: #{tpu_custom_call.1} parent=1 // loop_header_branch
      %25 = sbr.rel (%p23) target = $region8
    $region5: #{tpu_custom_call.1} parent=1 // loop_body
      %s27 = ssub.s32 %s22, 1
      %s28 = ssub.s32 %s22, 2
      %s29 = sadd.s32 %s22, 1
      %s30 = ssub.s32 %s22, %s29
      %p31 = scmp.eq.s32.totalorder %s30, 0
      %s33 = sadd.s32 %s32, 1
      %s34 = scalar_select %p31, %s32, %s33
      %p37 = pneg %p31
      %p38 = scmp.eq.s32.totalorder %s22, 1
      %p39 = por %p37, %p38
      %p40 = scmp.ne.s32.totalorder %s32, %s35
      %p41 = scmp.eq.s32.totalorder %s22, 0
      %p42 = por %p40, %p41
      %p43 = scmp.ne.s32.totalorder %s32, %s35
      %p44 = scmp.eq.s32.totalorder %s27, 1
      %p45 = por %p43, %p44
      %p46 = scmp.ne.s32.totalorder %s35, %s36
      %p47 = scmp.eq.s32.totalorder %s27, 0
      %p48 = por %p46, %p47
      %p49 = scmp.ne.s32.totalorder %s35, %s36
      %p50 = scmp.eq.s32.totalorder %s28, 1
      %p51 = por %p49, %p50
      %p53 = scmp.ne.s32.totalorder %s36, %s52
      %p54 = scmp.eq.s32.totalorder %s28, 0
      %p55 = por %p53, %p54
      %s56 = ssub.s32 %s22, %s29
      %p57 = scmp.eq.s32.totalorder %s56, 0
      %s59 = sadd.s32 %s58, 1
      %s60 = scalar_select %p57, %s58, %s59
      %p63 = pneg %p57
      %p64 = scmp.eq.s32.totalorder %s22, 1
      %p65 = por %p63, %p64
      %p66 = scmp.ne.s32.totalorder %s58, %s61
      %p67 = scmp.eq.s32.totalorder %s22, 0
      %p68 = por %p66, %p67
      %p69 = scmp.ne.s32.totalorder %s58, %s61
      %p70 = scmp.eq.s32.totalorder %s27, 1
      %p71 = por %p69, %p70
      %p72 = scmp.ne.s32.totalorder %s61, %s62
      %p73 = scmp.eq.s32.totalorder %s27, 0
      %p74 = por %p72, %p73
      %p75 = scmp.ne.s32.totalorder %s61, %s62
      %p76 = scmp.eq.s32.totalorder %s28, 1
      %p77 = por %p75, %p76
      %p79 = scmp.ne.s32.totalorder %s62, %s78
      %p80 = scmp.eq.s32.totalorder %s28, 0
      %p81 = por %p79, %p80
      %s83 = sadd.s32 %s82, 1
      %p86 = scmp.eq.s32.totalorder %s22, 1
      %p87 = scmp.ne.s32.totalorder %s82, %s84
      %p88 = scmp.eq.s32.totalorder %s22, 0
      %p89 = por %p87, %p88
      %p90 = scmp.ne.s32.totalorder %s82, %s84
      %p91 = scmp.eq.s32.totalorder %s27, 1
      %p92 = por %p90, %p91
      %p93 = scmp.ne.s32.totalorder %s84, %s85
      %p94 = scmp.eq.s32.totalorder %s27, 0
      %p95 = por %p93, %p94
      %p96 = scmp.ne.s32.totalorder %s84, %s85
      %p97 = scmp.eq.s32.totalorder %s28, 1
      %p98 = por %p96, %p97
      %p100 = scmp.ne.s32.totalorder %s85, %s99
      %p101 = scmp.eq.s32.totalorder %s28, 0
      %p102 = por %p100, %p101
      %s104 = sadd.s32 %s103, 1
      %p107 = scmp.eq.s32.totalorder %s22, 1
      %p108 = scmp.ne.s32.totalorder %s103, %s105
      %p109 = scmp.eq.s32.totalorder %s22, 0
      %p110 = por %p108, %p109
      %p111 = scmp.ne.s32.totalorder %s103, %s105
      %p112 = scmp.eq.s32.totalorder %s27, 1
      %p113 = por %p111, %p112
      %p114 = scmp.ne.s32.totalorder %s105, %s106
      %p115 = scmp.eq.s32.totalorder %s27, 0
      %p116 = por %p114, %p115
      %p117 = scmp.ne.s32.totalorder %s105, %s106
      %p118 = scmp.eq.s32.totalorder %s28, 1
      %p119 = por %p117, %p118
      %p121 = scmp.ne.s32.totalorder %s106, %s120
      %p122 = scmp.eq.s32.totalorder %s28, 0
      %p123 = por %p121, %p122
      %s125 = sadd.s32 %s124, 1
      %p128 = scmp.eq.s32.totalorder %s22, 1
      %p129 = scmp.ne.s32.totalorder %s124, %s126
      %p130 = scmp.eq.s32.totalorder %s22, 0
      %p131 = por %p129, %p130
      %p132 = scmp.ne.s32.totalorder %s124, %s126
      %p133 = scmp.eq.s32.totalorder %s27, 1
      %p134 = por %p132, %p133
      %p135 = scmp.ne.s32.totalorder %s126, %s127
      %p136 = scmp.eq.s32.totalorder %s27, 0
      %p137 = por %p135, %p136
      %p138 = scmp.ne.s32.totalorder %s126, %s127
      %p139 = scmp.eq.s32.totalorder %s28, 1
      %p140 = por %p138, %p139
      %p142 = scmp.ne.s32.totalorder %s127, %s141
      %p143 = scmp.eq.s32.totalorder %s28, 0
      %p144 = por %p142, %p143
      %s145 = ssub.s32 %s22, %s29
      %p146 = scmp.eq.s32.totalorder %s145, 0
      %s148 = sadd.s32 %s147, 1
      %s149 = scalar_select %p146, %s147, %s148
      %p152 = pneg %p146
      %p153 = scmp.eq.s32.totalorder %s22, 1
      %p154 = por %p152, %p153
      %p155 = scmp.ne.s32.totalorder %s147, %s150
      %p156 = scmp.eq.s32.totalorder %s22, 0
      %p157 = por %p155, %p156
      %p158 = scmp.ne.s32.totalorder %s147, %s150
      %p159 = scmp.eq.s32.totalorder %s27, 1
      %p160 = por %p158, %p159
      %p161 = scmp.ne.s32.totalorder %s150, %s151
      %p162 = scmp.eq.s32.totalorder %s27, 0
      %p163 = por %p161, %p162
      %p164 = scmp.ne.s32.totalorder %s150, %s151
      %p165 = scmp.eq.s32.totalorder %s28, 1
      %p166 = por %p164, %p165
      %p168 = scmp.ne.s32.totalorder %s151, %s167
      %p169 = scmp.eq.s32.totalorder %s28, 0
      %p170 = por %p168, %p169
      %p171 = scmp.le.s32.totalorder 1, %s22
      %p172 = scmp.lt.s32.totalorder %s22, 3
      %p173 = pnand %p171, %p172
      %p174 = pneg %p173
      // Predicated region
      $region9: #{tpu_custom_call.1} parent=5 // pred_check
        _
      $region10: #{tpu_custom_call.1} parent=5 // pred_check_branch
        %176 = sbr.rel (%p173) target = $region12
      $region11: #{tpu_custom_call.1} parent=5 // pred_region
        %s177 = ssub.s32 %s22, 1
        // Predicated region
        $region13: #{tpu_custom_call.1} parent=11 // pred_check
          %p178 = pneg %p95
        $region14: #{tpu_custom_call.1} parent=11 // pred_check_branch
          %180 = sbr.rel (%p178) target = $region16
        $region15: #{tpu_custom_call.1} parent=11 // pred_region
          %s182 = ssub.s32 64, 64
          %183 = vsyncadd [#allocation5], %s182
          %s185 = sshll.u32 %s2, 4
          %s186 = int_to_ptr.vmem [resolvable:$true] %s185
          %188 = dma.vmem_to_smem %s186, 64, [#allocation8], [#allocation5]
        $region16: #{tpu_custom_call.1} parent=11 // pred_fallthru
          _
        // Predicated region
        $region17: #{tpu_custom_call.1} parent=11 // pred_check
          %p189 = pneg %p116
        $region18: #{tpu_custom_call.1} parent=11 // pred_check_branch
          %191 = sbr.rel (%p189) target = $region20
        $region19: #{tpu_custom_call.1} parent=11 // pred_region
          %s193 = ssub.s32 64, 64
          %194 = vsyncadd [#allocation10], %s193
          %s196 = sshll.u32 %s3, 4
          %s197 = int_to_ptr.vmem [resolvable:$true] %s196
          %199 = dma.vmem_to_smem %s197, 64, [#allocation9], [#allocation10]
        $region20: #{tpu_custom_call.1} parent=11 // pred_fallthru
          _
        // Predicated region
        $region21: #{tpu_custom_call.1} parent=11 // pred_check
          %p200 = pneg %p137
        $region22: #{tpu_custom_call.1} parent=11 // pred_check_branch
          %202 = sbr.rel (%p200) target = $region24
        $region23: #{tpu_custom_call.1} parent=11 // pred_region
          %s204 = ssub.s32 1024, 1024
          %205 = vsyncadd [#allocation7], %s204
          %s206 = sshll.u32 [#allocation11], 4
          %s207 = int_to_ptr.vmem [resolvable:$true] %s206
          %212 = dma.hbm_to_vmem [thread:$0]  %s4, 1024, %s207, [#allocation7], 128, 128, 8
        $region24: #{tpu_custom_call.1} parent=11 // pred_fallthru
          _
      $region12: #{tpu_custom_call.1} parent=5 // pred_fallthru
        _
      %p213 = scmp.lt.s32.totalorder %s22, 2
      // Predicated region
      $region25: #{tpu_custom_call.1} parent=5 // pred_check
        %p214 = pneg %p213
      $region26: #{tpu_custom_call.1} parent=5 // pred_check_branch
        %216 = sbr.rel (%p214) target = $region28
      $region27: #{tpu_custom_call.1} parent=5 // pred_region
        // Predicated region
        $region29: #{tpu_custom_call.1} parent=27 // pred_check
          %p217 = pneg %p42
        $region30: #{tpu_custom_call.1} parent=27 // pred_check_branch
          %219 = sbr.rel (%p217) target = $region32
        $region31: #{tpu_custom_call.1} parent=27 // pred_region
          %s220 = sand.u32 %s32, 1
          %s221 = scalar_lea.sflag [#allocation3], %s220
          %s222 = sand.u32 %s32, 1
          %s223 = smul.addr %s222, 64
          %s224 = scalar_lea.vmem [#allocation2], %s223
          %s226 = ssub.s32 1024, 1024
          %227 = vsyncadd %s221, %s226
          %s228 = smul.addr %s22, 8
          %s229 = smul.addr %s228, 128
          %s230 = scalar_lea.hbm %s0, %s229
          %s231 = sshll.u32 %s224, 4
          %s232 = int_to_ptr.vmem [resolvable:$true] %s231
          %237 = dma.hbm_to_vmem [thread:$0]  %s230, 1024, %s232, %s221, 128, 128, 8
        $region32: #{tpu_custom_call.1} parent=27 // pred_fallthru
          _
        // Predicated region
        $region33: #{tpu_custom_call.1} parent=27 // pred_check
          %p238 = pneg %p68
        $region34: #{tpu_custom_call.1} parent=27 // pred_check_branch
          %240 = sbr.rel (%p238) target = $region36
        $region35: #{tpu_custom_call.1} parent=27 // pred_region
          %s241 = sand.u32 %s22, 1
          %s242 = scalar_lea.sflag [#allocation7], %s241
          %s243 = sand.u32 %s58, 1
          %s244 = smul.addr %s243, 64
          %s245 = scalar_lea.vmem [#allocation6], %s244
          %s247 = ssub.s32 1024, 1024
          %248 = vsyncadd %s242, %s247
          %s249 = smul.addr %s22, 8
          %s250 = smul.addr %s249, 128
          %s251 = scalar_lea.hbm %s1, %s250
          %s252 = sshll.u32 %s245, 4
          %s253 = int_to_ptr.vmem [resolvable:$true] %s252
          %258 = dma.hbm_to_vmem [thread:$0]  %s251, 1024, %s253, %s242, 128, 128, 8
        $region36: #{tpu_custom_call.1} parent=27 // pred_fallthru
          _
      $region28: #{tpu_custom_call.1} parent=5 // pred_fallthru
        _
      %p259 = scmp.le.s32.totalorder 1, %s22
      %p260 = scmp.lt.s32.totalorder %s22, 3
      %p261 = pnand %p259, %p260
      %p262 = pneg %p261
      // Predicated region
      $region37: #{tpu_custom_call.1} parent=5 // pred_check
        _
      $region38: #{tpu_custom_call.1} parent=5 // pred_check_branch
        %264 = sbr.rel (%p261) target = $region40
      $region39: #{tpu_custom_call.1} parent=5 // pred_region
        %s265 = ssub.s32 %s22, 1
        %s266 = sand.u32 %s35, 1
        %s267 = scalar_lea.sflag [#allocation3], %s266
        %s268 = sand.u32 %s35, 1
        %s269 = smul.addr %s268, 64
        %s270 = scalar_lea.vmem [#allocation2], %s269
        // Predicated region
        $region41: #{tpu_custom_call.1} parent=39 // pred_check
          %p271 = pneg %p48
        $region42: #{tpu_custom_call.1} parent=39 // pred_check_branch
          %273 = sbr.rel (%p271) target = $region44
        $region43: #{tpu_custom_call.1} parent=39 // pred_region
          %274 = dma.done %s267, 1024
        $region44: #{tpu_custom_call.1} parent=39 // pred_fallthru
          _
        %s275 = sand.u32 %s27, 1
        %s276 = scalar_lea.sflag [#allocation7], %s275
        %s277 = sand.u32 %s61, 1
        %s278 = smul.addr %s277, 64
        %s279 = scalar_lea.vmem [#allocation6], %s278
        // Predicated region
        $region45: #{tpu_custom_call.1} parent=39 // pred_check
          %p280 = pneg %p74
        $region46: #{tpu_custom_call.1} parent=39 // pred_check_branch
          %282 = sbr.rel (%p280) target = $region48
        $region47: #{tpu_custom_call.1} parent=39 // pred_region
          %283 = dma.done %s276, 1024
        $region48: #{tpu_custom_call.1} parent=39 // pred_fallthru
          _
        // Predicated region
        $region49: #{tpu_custom_call.1} parent=39 // pred_check
          %p284 = pneg %p95
        $region50: #{tpu_custom_call.1} parent=39 // pred_check_branch
          %286 = sbr.rel (%p284) target = $region52
        $region51: #{tpu_custom_call.1} parent=39 // pred_region
          %287 = dma.done [#allocation5], 64
        $region52: #{tpu_custom_call.1} parent=39 // pred_fallthru
          _
        // Predicated region
        $region53: #{tpu_custom_call.1} parent=39 // pred_check
          %p288 = pneg %p116
        $region54: #{tpu_custom_call.1} parent=39 // pred_check_branch
          %290 = sbr.rel (%p288) target = $region56
        $region55: #{tpu_custom_call.1} parent=39 // pred_region
          %291 = dma.done [#allocation10], 64
        $region56: #{tpu_custom_call.1} parent=39 // pred_fallthru
          _
        // Predicated region
        $region57: #{tpu_custom_call.1} parent=39 // pred_check
          %p292 = pneg %p137
        $region58: #{tpu_custom_call.1} parent=39 // pred_check_branch
          %294 = sbr.rel (%p292) target = $region60
        $region59: #{tpu_custom_call.1} parent=39 // pred_region
          %295 = dma.done [#allocation7], 1024
        $region60: #{tpu_custom_call.1} parent=39 // pred_fallthru
          _
        %296 = sfence
        %s297 = sand.u32 %s35, 1
        %s298 = scalar_lea.sflag [#allocation3], %s297
        %s299 = sand.u32 %s35, 1
        %s300 = smul.addr %s299, 64
        %s301 = scalar_lea.vmem [#allocation2], %s300
        %p302 = pneg %p48
        %p303 = pneg %p45
        %s304 = sand.u32 %s27, 1
        %s305 = scalar_lea.sflag [#allocation7], %s304
        %s306 = sand.u32 %s61, 1
        %s307 = smul.addr %s306, 64
        %s308 = scalar_lea.vmem [#allocation6], %s307
        %p309 = pneg %p74
        %p310 = pneg %p71
        %p311 = pneg %p95
        %p312 = pneg %p92
        %p313 = pneg %p116
        %p314 = pneg %p113
        %p315 = pneg %p137
        %p316 = pneg %p134
        %p317 = pneg %p163
        %p318 = pneg %p160
        %s319 = sand.u32 %s150, 1
        %s320 = scalar_lea.sflag [#allocation4], %s319
        %s321 = sand.u32 %s150, 1
        %s322 = smul.addr %s321, 64
        %s323 = scalar_lea.vmem [#allocation12], %s322
        %s324 = sld [smem:[#allocation8]]
        %s325 = sld [smem:[#allocation8 + $0x1]]
        %s326 = sld [smem:[#allocation8 + $0x2]]
        %s327 = sld [smem:[#allocation8 + $0x3]]
        %s328 = sld [smem:[#allocation8 + $0x80]]
        %s329 = sld [smem:[#allocation8 + $0x81]]
        %s330 = sld [smem:[#allocation8 + $0x82]]
        %s331 = sld [smem:[#allocation8 + $0x83]]
        %s332 = sld [smem:[#allocation8 + $0x100]]
        %s333 = sld [smem:[#allocation8 + $0x101]]
        %s334 = sld [smem:[#allocation8 + $0x102]]
        %s335 = sld [smem:[#allocation8 + $0x103]]
        %s336 = sld [smem:[#allocation8 + $0x180]]
        %s337 = sld [smem:[#allocation8 + $0x181]]
        %s338 = sld [smem:[#allocation8 + $0x182]]
        %s339 = sld [smem:[#allocation8 + $0x183]]
        %s340 = sld [smem:[#allocation9]]
        %s341 = sld [smem:[#allocation9 + $0x1]]
        %s342 = sld [smem:[#allocation9 + $0x2]]
        %s343 = sld [smem:[#allocation9 + $0x3]]
        %s344 = sld [smem:[#allocation9 + $0x80]]
        %s345 = sld [smem:[#allocation9 + $0x81]]
        %s346 = sld [smem:[#allocation9 + $0x82]]
        %s347 = sld [smem:[#allocation9 + $0x83]]
        %s348 = sld [smem:[#allocation9 + $0x100]]
        %s349 = sld [smem:[#allocation9 + $0x101]]
        %s350 = sld [smem:[#allocation9 + $0x102]]
        %s351 = sld [smem:[#allocation9 + $0x103]]
        %s352 = sld [smem:[#allocation9 + $0x180]]
        %s353 = sld [smem:[#allocation9 + $0x181]]
        %s354 = sld [smem:[#allocation9 + $0x182]]
        %s355 = sld [smem:[#allocation9 + $0x183]]
        %v356 = vld [vmem:[#allocation11] sm:$0xff]
        %v357 = vld [vmem:[#allocation11 + $0x8] sm:$0xff]
        %v358 = vld [vmem:[#allocation11 + $0x10] sm:$0xff]
        %v359 = vld [vmem:[#allocation11 + $0x18] sm:$0xff]
        %v360 = vld [vmem:[#allocation11 + $0x20] sm:$0xff]
        %v361 = vld [vmem:[#allocation11 + $0x28] sm:$0xff]
        %v362 = vld [vmem:[#allocation11 + $0x30] sm:$0xff]
        %v363 = vld [vmem:[#allocation11 + $0x38] sm:$0xff]
        %v364 = vld [vmem:[%s270] sm:$0xff]
        %v365 = vld [vmem:[%s270 + $0x8] sm:$0xff]
        %v366 = vld [vmem:[%s270 + $0x10] sm:$0xff]
        %v367 = vld [vmem:[%s270 + $0x18] sm:$0xff]
        %v368 = vld [vmem:[%s270 + $0x20] sm:$0xff]
        %v369 = vld [vmem:[%s270 + $0x28] sm:$0xff]
        %v370 = vld [vmem:[%s270 + $0x30] sm:$0xff]
        %v371 = vld [vmem:[%s270 + $0x38] sm:$0xff]
        %v372 = vstv %s324
        %v373 = vmul.f32 %v364, %v372
        %v374 = vmul.f32 %v365, %v372
        %v375 = vstv %s325
        %v376 = vmul.f32 %v366, %v375
        %v377 = vmul.f32 %v367, %v375
        %v378 = vadd.f32 %v373, %v376
        %v379 = vadd.f32 %v374, %v377
        %v380 = vstv %s326
        %v381 = vmul.f32 %v368, %v380
        %v382 = vmul.f32 %v369, %v380
        %v383 = vadd.f32 %v378, %v381
        %v384 = vadd.f32 %v379, %v382
        %v385 = vstv %s327
        %v386 = vmul.f32 %v370, %v385
        %v387 = vmul.f32 %v371, %v385
        %v388 = vadd.f32 %v383, %v386
        %v389 = vadd.f32 %v384, %v387
        %v390 = vstv %s328
        %v391 = vmul.f32 %v364, %v390
        %v392 = vmul.f32 %v365, %v390
        %v393 = vstv %s329
        %v394 = vmul.f32 %v366, %v393
        %v395 = vmul.f32 %v367, %v393
        %v396 = vadd.f32 %v391, %v394
        %v397 = vadd.f32 %v392, %v395
        %v398 = vstv %s330
        %v399 = vmul.f32 %v368, %v398
        %v400 = vmul.f32 %v369, %v398
        %v401 = vadd.f32 %v396, %v399
        %v402 = vadd.f32 %v397, %v400
        %v403 = vstv %s331
        %v404 = vmul.f32 %v370, %v403
        %v405 = vmul.f32 %v371, %v403
        %v406 = vadd.f32 %v401, %v404
        %v407 = vadd.f32 %v402, %v405
        %v408 = vstv %s332
        %v409 = vmul.f32 %v364, %v408
        %v410 = vmul.f32 %v365, %v408
        %v411 = vstv %s333
        %v412 = vmul.f32 %v366, %v411
        %v413 = vmul.f32 %v367, %v411
        %v414 = vadd.f32 %v409, %v412
        %v415 = vadd.f32 %v410, %v413
        %v416 = vstv %s334
        %v417 = vmul.f32 %v368, %v416
        %v418 = vmul.f32 %v369, %v416
        %v419 = vadd.f32 %v414, %v417
        %v420 = vadd.f32 %v415, %v418
        %v421 = vstv %s335
        %v422 = vmul.f32 %v370, %v421
        %v423 = vmul.f32 %v371, %v421
        %v424 = vadd.f32 %v419, %v422
        %v425 = vadd.f32 %v420, %v423
        %v426 = vstv %s336
        %v427 = vmul.f32 %v364, %v426
        %v428 = vmul.f32 %v365, %v426
        %v429 = vstv %s337
        %v430 = vmul.f32 %v366, %v429
        %v431 = vmul.f32 %v367, %v429
        %v432 = vadd.f32 %v427, %v430
        %v433 = vadd.f32 %v428, %v431
        %v434 = vstv %s338
        %v435 = vmul.f32 %v368, %v434
        %v436 = vmul.f32 %v369, %v434
        %v437 = vadd.f32 %v432, %v435
        %v438 = vadd.f32 %v433, %v436
        %v439 = vstv %s339
        %v440 = vmul.f32 %v370, %v439
        %v441 = vmul.f32 %v371, %v439
        %v442 = vadd.f32 %v437, %v440
        %v443 = vadd.f32 %v438, %v441
        %v444 = vld [vmem:[%s279] sm:$0xff]
        %v445 = vld [vmem:[%s279 + $0x8] sm:$0xff]
        %v446 = vld [vmem:[%s279 + $0x10] sm:$0xff]
        %v447 = vld [vmem:[%s279 + $0x18] sm:$0xff]
        %v448 = vld [vmem:[%s279 + $0x20] sm:$0xff]
        %v449 = vld [vmem:[%s279 + $0x28] sm:$0xff]
        %v450 = vld [vmem:[%s279 + $0x30] sm:$0xff]
        %v451 = vld [vmem:[%s279 + $0x38] sm:$0xff]
        %v452 = vstv %s340
        %v453 = vmul.f32 %v444, %v452
        %v454 = vmul.f32 %v445, %v452
        %v455 = vstv %s341
        %v456 = vmul.f32 %v446, %v455
        %v457 = vmul.f32 %v447, %v455
        %v458 = vadd.f32 %v453, %v456
        %v459 = vadd.f32 %v454, %v457
        %v460 = vstv %s342
        %v461 = vmul.f32 %v448, %v460
        %v462 = vmul.f32 %v449, %v460
        %v463 = vadd.f32 %v458, %v461
        %v464 = vadd.f32 %v459, %v462
        %v465 = vstv %s343
        %v466 = vmul.f32 %v450, %v465
        %v467 = vmul.f32 %v451, %v465
        %v468 = vadd.f32 %v463, %v466
        %v469 = vadd.f32 %v464, %v467
        %v470 = vstv %s344
        %v471 = vmul.f32 %v444, %v470
        %v472 = vmul.f32 %v445, %v470
        %v473 = vstv %s345
        %v474 = vmul.f32 %v446, %v473
        %v475 = vmul.f32 %v447, %v473
        %v476 = vadd.f32 %v471, %v474
        %v477 = vadd.f32 %v472, %v475
        %v478 = vstv %s346
        %v479 = vmul.f32 %v448, %v478
        %v480 = vmul.f32 %v449, %v478
        %v481 = vadd.f32 %v476, %v479
        %v482 = vadd.f32 %v477, %v480
        %v483 = vstv %s347
        %v484 = vmul.f32 %v450, %v483
        %v485 = vmul.f32 %v451, %v483
        %v486 = vadd.f32 %v481, %v484
        %v487 = vadd.f32 %v482, %v485
        %v488 = vstv %s348
        %v489 = vmul.f32 %v444, %v488
        %v490 = vmul.f32 %v445, %v488
        %v491 = vstv %s349
        %v492 = vmul.f32 %v446, %v491
        %v493 = vmul.f32 %v447, %v491
        %v494 = vadd.f32 %v489, %v492
        %v495 = vadd.f32 %v490, %v493
        %v496 = vstv %s350
        %v497 = vmul.f32 %v448, %v496
        %v498 = vmul.f32 %v449, %v496
        %v499 = vadd.f32 %v494, %v497
        %v500 = vadd.f32 %v495, %v498
        %v501 = vstv %s351
        %v502 = vmul.f32 %v450, %v501
        %v503 = vmul.f32 %v451, %v501
        %v504 = vadd.f32 %v499, %v502
        %v505 = vadd.f32 %v500, %v503
        %v506 = vstv %s352
        %v507 = vmul.f32 %v444, %v506
        %v508 = vmul.f32 %v445, %v506
        %v509 = vstv %s353
        %v510 = vmul.f32 %v446, %v509
        %v511 = vmul.f32 %v447, %v509
        %v512 = vadd.f32 %v507, %v510
        %v513 = vadd.f32 %v508, %v511
        %v514 = vstv %s354
        %v515 = vmul.f32 %v448, %v514
        %v516 = vmul.f32 %v449, %v514
        %v517 = vadd.f32 %v512, %v515
        %v518 = vadd.f32 %v513, %v516
        %v519 = vstv %s355
        %v520 = vmul.f32 %v450, %v519
        %v521 = vmul.f32 %v451, %v519
        %v522 = vadd.f32 %v517, %v520
        %v523 = vadd.f32 %v518, %v521
        %vm524 = vcmask 130048
        %v526 = vsel %vm524, %v356, 0
        %v529 = vsel %vm524, %v357, 0
        %v532 = vsel %vm524, %v388, 0
        %v535 = vsel %vm524, %v389, 0
        %537 = vmatprep.subr.mxu0 0.0
        %538 = vmatpush1.xpose.msra.mxu0 %v532
        %539 = vmatprep.subr.mxu0 0.0
        %540 = vmatpush1.xpose.msra.mxu0 %v535
        %541 = vmatprep.subr.mxu0 0.0
        %542 = vmatpush1.xpose.msra.mxu0 0.0
        %543 = vmatprep.subr.mxu0 0.0
        %544 = vmatpush1.xpose.msra.mxu0 0.0
        %545 = vmatprep.subr.mxu0 0.0
        %546 = vmatpush1.xpose.msra.mxu0 0.0
        %547 = vmatprep.subr.mxu0 0.0
        %548 = vmatpush1.xpose.msra.mxu0 0.0
        %549 = vmatprep.subr.mxu0 0.0
        %550 = vmatpush1.xpose.msra.mxu0 0.0
        %551 = vmatprep.subr.mxu0 0.0
        %552 = vmatpush1.xpose.msra.mxu0 0.0
        %553 = vmatprep.subr.mxu0 0.0
        %554 = vmatpush1.xpose.msra.mxu0 0.0
        %555 = vmatprep.subr.mxu0 0.0
        %556 = vmatpush1.xpose.msra.mxu0 0.0
        %557 = vmatprep.subr.mxu0 0.0
        %558 = vmatpush1.xpose.msra.mxu0 0.0
        %559 = vmatprep.subr.mxu0 0.0
        %560 = vmatpush1.xpose.msra.mxu0 0.0
        %561 = vmatprep.subr.mxu0 0.0
        %562 = vmatpush1.xpose.msra.mxu0 0.0
        %563 = vmatprep.subr.mxu0 0.0
        %564 = vmatpush1.xpose.msra.mxu0 0.0
        %565 = vmatprep.subr.mxu0 0.0
        %566 = vmatpush1.xpose.msra.mxu0 0.0
        %567 = vmatprep.subr.mxu0 0.0
        %568 = vmatpush1.xpose.msra.mxu0 0.0
        %569 = vmatprep.subr.mxu0 0.0
        %570 = vmatpush1.xpose.msra.mxu0 0.0
        %571 = vmatprep.subr.mxu0 0.0
        %572 = vmatpush1.xpose.msra.mxu0 0.0
        %573 = vmatprep.subr.mxu0 0.0
        %574 = vmatpush1.xpose.msra.mxu0 0.0
        %575 = vmatprep.subr.mxu0 0.0
        %576 = vmatpush1.xpose.msra.mxu0 0.0
        %577 = vmatprep.subr.mxu0 0.0
        %578 = vmatpush1.xpose.msra.mxu0 0.0
        %579 = vmatprep.subr.mxu0 0.0
        %580 = vmatpush1.xpose.msra.mxu0 0.0
        %581 = vmatprep.subr.mxu0 0.0
        %582 = vmatpush1.xpose.msra.mxu0 0.0
        %583 = vmatprep.subr.mxu0 0.0
        %584 = vmatpush1.xpose.msra.mxu0 0.0
        %585 = vmatprep.subr.mxu0 0.0
        %586 = vmatpush1.xpose.msra.mxu0 0.0
        %587 = vmatprep.subr.mxu0 0.0
        %588 = vmatpush1.xpose.msra.mxu0 0.0
        %589 = vmatprep.subr.mxu0 0.0
        %590 = vmatpush1.xpose.msra.mxu0 0.0
        %591 = vmatprep.subr.mxu0 0.0
        %592 = vmatpush1.xpose.msra.mxu0 0.0
        %593 = vmatprep.subr.mxu0 0.0
        %594 = vmatpush1.xpose.msra.mxu0 0.0
        %595 = vmatprep.subr.mxu0 0.0
        %596 = vmatpush1.xpose.msra.mxu0 0.0
        %597 = vmatprep.subr.mxu0 0.0
        %598 = vmatpush1.xpose.msra.mxu0 0.0
        %599 = vmatprep.subr.mxu0 0.0
        %600 = vmatpush1.xpose.msra.mxu0 0.0
        %601 = vmatprep.mubr.f32.mxu0 0.0
        %602 = vmatmul.mubr.f32.gmra.mrb[0].mxu0 %v526
        %v603 = vpop.f32.mrb[0].mxu0
        %v604 = vadd.f32 0.0, %v603
        %v605 = vpop.f32.mrb[0].mxu0
        %606 = vmatprep.mubr.f32.mxu0 0.0
        %607 = vmatmul.mubr.f32.gmra.mrb[0].mxu0 %v529
        %v608 = vpop.f32.mrb[0].mxu0
        %v609 = vadd.f32 0.0, %v608
        %v610 = vpop.f32.mrb[0].mxu0
        %611 = vdwg.mxu0
        %v613 = vsel %vm524, %v358, 0
        %v616 = vsel %vm524, %v359, 0
        %v619 = vsel %vm524, %v406, 0
        %v622 = vsel %vm524, %v407, 0
        %624 = vmatprep.subr.mxu0 0.0
        %625 = vmatpush1.xpose.msra.mxu0 %v619
        %626 = vmatprep.subr.mxu0 0.0
        %627 = vmatpush1.xpose.msra.mxu0 %v622
        %628 = vmatprep.subr.mxu0 0.0
        %629 = vmatpush1.xpose.msra.mxu0 0.0
        %630 = vmatprep.subr.mxu0 0.0
        %631 = vmatpush1.xpose.msra.mxu0 0.0
        %632 = vmatprep.subr.mxu0 0.0
        %633 = vmatpush1.xpose.msra.mxu0 0.0
        %634 = vmatprep.subr.mxu0 0.0
        %635 = vmatpush1.xpose.msra.mxu0 0.0
        %636 = vmatprep.subr.mxu0 0.0
        %637 = vmatpush1.xpose.msra.mxu0 0.0
        %638 = vmatprep.subr.mxu0 0.0
        %639 = vmatpush1.xpose.msra.mxu0 0.0
        %640 = vmatprep.subr.mxu0 0.0
        %641 = vmatpush1.xpose.msra.mxu0 0.0
        %642 = vmatprep.subr.mxu0 0.0
        %643 = vmatpush1.xpose.msra.mxu0 0.0
        %644 = vmatprep.subr.mxu0 0.0
        %645 = vmatpush1.xpose.msra.mxu0 0.0
        %646 = vmatprep.subr.mxu0 0.0
        %647 = vmatpush1.xpose.msra.mxu0 0.0
        %648 = vmatprep.subr.mxu0 0.0
        %649 = vmatpush1.xpose.msra.mxu0 0.0
        %650 = vmatprep.subr.mxu0 0.0
        %651 = vmatpush1.xpose.msra.mxu0 0.0
        %652 = vmatprep.subr.mxu0 0.0
        %653 = vmatpush1.xpose.msra.mxu0 0.0
        %654 = vmatprep.subr.mxu0 0.0
        %655 = vmatpush1.xpose.msra.mxu0 0.0
        %656 = vmatprep.subr.mxu0 0.0
        %657 = vmatpush1.xpose.msra.mxu0 0.0
        %658 = vmatprep.subr.mxu0 0.0
        %659 = vmatpush1.xpose.msra.mxu0 0.0
        %660 = vmatprep.subr.mxu0 0.0
        %661 = vmatpush1.xpose.msra.mxu0 0.0
        %662 = vmatprep.subr.mxu0 0.0
        %663 = vmatpush1.xpose.msra.mxu0 0.0
        %664 = vmatprep.subr.mxu0 0.0
        %665 = vmatpush1.xpose.msra.mxu0 0.0
        %666 = vmatprep.subr.mxu0 0.0
        %667 = vmatpush1.xpose.msra.mxu0 0.0
        %668 = vmatprep.subr.mxu0 0.0
        %669 = vmatpush1.xpose.msra.mxu0 0.0
        %670 = vmatprep.subr.mxu0 0.0
        %671 = vmatpush1.xpose.msra.mxu0 0.0
        %672 = vmatprep.subr.mxu0 0.0
        %673 = vmatpush1.xpose.msra.mxu0 0.0
        %674 = vmatprep.subr.mxu0 0.0
        %675 = vmatpush1.xpose.msra.mxu0 0.0
        %676 = vmatprep.subr.mxu0 0.0
        %677 = vmatpush1.xpose.msra.mxu0 0.0
        %678 = vmatprep.subr.mxu0 0.0
        %679 = vmatpush1.xpose.msra.mxu0 0.0
        %680 = vmatprep.subr.mxu0 0.0
        %681 = vmatpush1.xpose.msra.mxu0 0.0
        %682 = vmatprep.subr.mxu0 0.0
        %683 = vmatpush1.xpose.msra.mxu0 0.0
        %684 = vmatprep.subr.mxu0 0.0
        %685 = vmatpush1.xpose.msra.mxu0 0.0
        %686 = vmatprep.subr.mxu0 0.0
        %687 = vmatpush1.xpose.msra.mxu0 0.0
        %688 = vmatprep.mubr.f32.mxu0 0.0
        %689 = vmatmul.mubr.f32.gmra.mrb[0].mxu0 %v613
        %v690 = vpop.f32.mrb[0].mxu0
        %v691 = vadd.f32 0.0, %v690
        %v692 = vpop.f32.mrb[0].mxu0
        %693 = vmatprep.mubr.f32.mxu0 0.0
        %694 = vmatmul.mubr.f32.gmra.mrb[0].mxu0 %v616
        %v695 = vpop.f32.mrb[0].mxu0
        %v696 = vadd.f32 0.0, %v695
        %v697 = vpop.f32.mrb[0].mxu0
        %698 = vdwg.mxu0
        %v700 = vsel %vm524, %v360, 0
        %v703 = vsel %vm524, %v361, 0
        %v706 = vsel %vm524, %v424, 0
        %v709 = vsel %vm524, %v425, 0
        %711 = vmatprep.subr.mxu0 0.0
        %712 = vmatpush1.xpose.msra.mxu0 %v706
        %713 = vmatprep.subr.mxu0 0.0
        %714 = vmatpush1.xpose.msra.mxu0 %v709
        %715 = vmatprep.subr.mxu0 0.0
        %716 = vmatpush1.xpose.msra.mxu0 0.0
        %717 = vmatprep.subr.mxu0 0.0
        %718 = vmatpush1.xpose.msra.mxu0 0.0
        %719 = vmatprep.subr.mxu0 0.0
        %720 = vmatpush1.xpose.msra.mxu0 0.0
        %721 = vmatprep.subr.mxu0 0.0
        %722 = vmatpush1.xpose.msra.mxu0 0.0
        %723 = vmatprep.subr.mxu0 0.0
        %724 = vmatpush1.xpose.msra.mxu0 0.0
        %725 = vmatprep.subr.mxu0 0.0
        %726 = vmatpush1.xpose.msra.mxu0 0.0
        %727 = vmatprep.subr.mxu0 0.0
        %728 = vmatpush1.xpose.msra.mxu0 0.0
        %729 = vmatprep.subr.mxu0 0.0
        %730 = vmatpush1.xpose.msra.mxu0 0.0
        %731 = vmatprep.subr.mxu0 0.0
        %732 = vmatpush1.xpose.msra.mxu0 0.0
        %733 = vmatprep.subr.mxu0 0.0
        %734 = vmatpush1.xpose.msra.mxu0 0.0
        %735 = vmatprep.subr.mxu0 0.0
        %736 = vmatpush1.xpose.msra.mxu0 0.0
        %737 = vmatprep.subr.mxu0 0.0
        %738 = vmatpush1.xpose.msra.mxu0 0.0
        %739 = vmatprep.subr.mxu0 0.0
        %740 = vmatpush1.xpose.msra.mxu0 0.0
        %741 = vmatprep.subr.mxu0 0.0
        %742 = vmatpush1.xpose.msra.mxu0 0.0
        %743 = vmatprep.subr.mxu0 0.0
        %744 = vmatpush1.xpose.msra.mxu0 0.0
        %745 = vmatprep.subr.mxu0 0.0
        %746 = vmatpush1.xpose.msra.mxu0 0.0
        %747 = vmatprep.subr.mxu0 0.0
        %748 = vmatpush1.xpose.msra.mxu0 0.0
        %749 = vmatprep.subr.mxu0 0.0
        %750 = vmatpush1.xpose.msra.mxu0 0.0
        %751 = vmatprep.subr.mxu0 0.0
        %752 = vmatpush1.xpose.msra.mxu0 0.0
        %753 = vmatprep.subr.mxu0 0.0
        %754 = vmatpush1.xpose.msra.mxu0 0.0
        %755 = vmatprep.subr.mxu0 0.0
        %756 = vmatpush1.xpose.msra.mxu0 0.0
        %757 = vmatprep.subr.mxu0 0.0
        %758 = vmatpush1.xpose.msra.mxu0 0.0
        %759 = vmatprep.subr.mxu0 0.0
        %760 = vmatpush1.xpose.msra.mxu0 0.0
        %761 = vmatprep.subr.mxu0 0.0
        %762 = vmatpush1.xpose.msra.mxu0 0.0
        %763 = vmatprep.subr.mxu0 0.0
        %764 = vmatpush1.xpose.msra.mxu0 0.0
        %765 = vmatprep.subr.mxu0 0.0
        %766 = vmatpush1.xpose.msra.mxu0 0.0
        %767 = vmatprep.subr.mxu0 0.0
        %768 = vmatpush1.xpose.msra.mxu0 0.0
        %769 = vmatprep.subr.mxu0 0.0
        %770 = vmatpush1.xpose.msra.mxu0 0.0
        %771 = vmatprep.subr.mxu0 0.0
        %772 = vmatpush1.xpose.msra.mxu0 0.0
        %773 = vmatprep.subr.mxu0 0.0
        %774 = vmatpush1.xpose.msra.mxu0 0.0
        %775 = vmatprep.mubr.f32.mxu0 0.0
        %776 = vmatmul.mubr.f32.gmra.mrb[0].mxu0 %v700
        %v777 = vpop.f32.mrb[0].mxu0
        %v778 = vadd.f32 0.0, %v777
        %v779 = vpop.f32.mrb[0].mxu0
        %780 = vmatprep.mubr.f32.mxu0 0.0
        %781 = vmatmul.mubr.f32.gmra.mrb[0].mxu0 %v703
        %v782 = vpop.f32.mrb[0].mxu0
        %v783 = vadd.f32 0.0, %v782
        %v784 = vpop.f32.mrb[0].mxu0
        %785 = vdwg.mxu0
        %v787 = vsel %vm524, %v362, 0
        %v790 = vsel %vm524, %v363, 0
        %v793 = vsel %vm524, %v442, 0
        %v796 = vsel %vm524, %v443, 0
        %798 = vmatprep.subr.mxu0 0.0
        %799 = vmatpush1.xpose.msra.mxu0 %v793
        %800 = vmatprep.subr.mxu0 0.0
        %801 = vmatpush1.xpose.msra.mxu0 %v796
        %802 = vmatprep.subr.mxu0 0.0
        %803 = vmatpush1.xpose.msra.mxu0 0.0
        %804 = vmatprep.subr.mxu0 0.0
        %805 = vmatpush1.xpose.msra.mxu0 0.0
        %806 = vmatprep.subr.mxu0 0.0
        %807 = vmatpush1.xpose.msra.mxu0 0.0
        %808 = vmatprep.subr.mxu0 0.0
        %809 = vmatpush1.xpose.msra.mxu0 0.0
        %810 = vmatprep.subr.mxu0 0.0
        %811 = vmatpush1.xpose.msra.mxu0 0.0
        %812 = vmatprep.subr.mxu0 0.0
        %813 = vmatpush1.xpose.msra.mxu0 0.0
        %814 = vmatprep.subr.mxu0 0.0
        %815 = vmatpush1.xpose.msra.mxu0 0.0
        %816 = vmatprep.subr.mxu0 0.0
        %817 = vmatpush1.xpose.msra.mxu0 0.0
        %818 = vmatprep.subr.mxu0 0.0
        %819 = vmatpush1.xpose.msra.mxu0 0.0
        %820 = vmatprep.subr.mxu0 0.0
        %821 = vmatpush1.xpose.msra.mxu0 0.0
        %822 = vmatprep.subr.mxu0 0.0
        %823 = vmatpush1.xpose.msra.mxu0 0.0
        %824 = vmatprep.subr.mxu0 0.0
        %825 = vmatpush1.xpose.msra.mxu0 0.0
        %826 = vmatprep.subr.mxu0 0.0
        %827 = vmatpush1.xpose.msra.mxu0 0.0
        %828 = vmatprep.subr.mxu0 0.0
        %829 = vmatpush1.xpose.msra.mxu0 0.0
        %830 = vmatprep.subr.mxu0 0.0
        %831 = vmatpush1.xpose.msra.mxu0 0.0
        %832 = vmatprep.subr.mxu0 0.0
        %833 = vmatpush1.xpose.msra.mxu0 0.0
        %834 = vmatprep.subr.mxu0 0.0
        %835 = vmatpush1.xpose.msra.mxu0 0.0
        %836 = vmatprep.subr.mxu0 0.0
        %837 = vmatpush1.xpose.msra.mxu0 0.0
        %838 = vmatprep.subr.mxu0 0.0
        %839 = vmatpush1.xpose.msra.mxu0 0.0
        %840 = vmatprep.subr.mxu0 0.0
        %841 = vmatpush1.xpose.msra.mxu0 0.0
        %842 = vmatprep.subr.mxu0 0.0
        %843 = vmatpush1.xpose.msra.mxu0 0.0
        %844 = vmatprep.subr.mxu0 0.0
        %845 = vmatpush1.xpose.msra.mxu0 0.0
        %846 = vmatprep.subr.mxu0 0.0
        %847 = vmatpush1.xpose.msra.mxu0 0.0
        %848 = vmatprep.subr.mxu0 0.0
        %849 = vmatpush1.xpose.msra.mxu0 0.0
        %850 = vmatprep.subr.mxu0 0.0
        %851 = vmatpush1.xpose.msra.mxu0 0.0
        %852 = vmatprep.subr.mxu0 0.0
        %853 = vmatpush1.xpose.msra.mxu0 0.0
        %854 = vmatprep.subr.mxu0 0.0
        %855 = vmatpush1.xpose.msra.mxu0 0.0
        %856 = vmatprep.subr.mxu0 0.0
        %857 = vmatpush1.xpose.msra.mxu0 0.0
        %858 = vmatprep.subr.mxu0 0.0
        %859 = vmatpush1.xpose.msra.mxu0 0.0
        %860 = vmatprep.subr.mxu0 0.0
        %861 = vmatpush1.xpose.msra.mxu0 0.0
        %862 = vmatprep.mubr.f32.mxu0 0.0
        %863 = vmatmul.mubr.f32.gmra.mrb[0].mxu0 %v787
        %v864 = vpop.f32.mrb[0].mxu0
        %v865 = vadd.f32 0.0, %v864
        %v866 = vpop.f32.mrb[0].mxu0
        %867 = vmatprep.mubr.f32.mxu0 0.0
        %868 = vmatmul.mubr.f32.gmra.mrb[0].mxu0 %v790
        %v869 = vpop.f32.mrb[0].mxu0
        %v870 = vadd.f32 0.0, %v869
        %v871 = vpop.f32.mrb[0].mxu0
        %872 = vdwg.mxu0
        %v874 = vsel %vm524, %v468, 0
        %v877 = vsel %vm524, %v469, 0
        %879 = vmatprep.subr.mxu0 0.0
        %880 = vmatpush1.xpose.msra.mxu0 %v874
        %881 = vmatprep.subr.mxu0 0.0
        %882 = vmatpush1.xpose.msra.mxu0 %v877
        %883 = vmatprep.subr.mxu0 0.0
        %884 = vmatpush1.xpose.msra.mxu0 0.0
        %885 = vmatprep.subr.mxu0 0.0
        %886 = vmatpush1.xpose.msra.mxu0 0.0
        %887 = vmatprep.subr.mxu0 0.0
        %888 = vmatpush1.xpose.msra.mxu0 0.0
        %889 = vmatprep.subr.mxu0 0.0
        %890 = vmatpush1.xpose.msra.mxu0 0.0
        %891 = vmatprep.subr.mxu0 0.0
        %892 = vmatpush1.xpose.msra.mxu0 0.0
        %893 = vmatprep.subr.mxu0 0.0
        %894 = vmatpush1.xpose.msra.mxu0 0.0
        %895 = vmatprep.subr.mxu0 0.0
        %896 = vmatpush1.xpose.msra.mxu0 0.0
        %897 = vmatprep.subr.mxu0 0.0
        %898 = vmatpush1.xpose.msra.mxu0 0.0
        %899 = vmatprep.subr.mxu0 0.0
        %900 = vmatpush1.xpose.msra.mxu0 0.0
        %901 = vmatprep.subr.mxu0 0.0
        %902 = vmatpush1.xpose.msra.mxu0 0.0
        %903 = vmatprep.subr.mxu0 0.0
        %904 = vmatpush1.xpose.msra.mxu0 0.0
        %905 = vmatprep.subr.mxu0 0.0
        %906 = vmatpush1.xpose.msra.mxu0 0.0
        %907 = vmatprep.subr.mxu0 0.0
        %908 = vmatpush1.xpose.msra.mxu0 0.0
        %909 = vmatprep.subr.mxu0 0.0
        %910 = vmatpush1.xpose.msra.mxu0 0.0
        %911 = vmatprep.subr.mxu0 0.0
        %912 = vmatpush1.xpose.msra.mxu0 0.0
        %913 = vmatprep.subr.mxu0 0.0
        %914 = vmatpush1.xpose.msra.mxu0 0.0
        %915 = vmatprep.subr.mxu0 0.0
        %916 = vmatpush1.xpose.msra.mxu0 0.0
        %917 = vmatprep.subr.mxu0 0.0
        %918 = vmatpush1.xpose.msra.mxu0 0.0
        %919 = vmatprep.subr.mxu0 0.0
        %920 = vmatpush1.xpose.msra.mxu0 0.0
        %921 = vmatprep.subr.mxu0 0.0
        %922 = vmatpush1.xpose.msra.mxu0 0.0
        %923 = vmatprep.subr.mxu0 0.0
        %924 = vmatpush1.xpose.msra.mxu0 0.0
        %925 = vmatprep.subr.mxu0 0.0
        %926 = vmatpush1.xpose.msra.mxu0 0.0
        %927 = vmatprep.subr.mxu0 0.0
        %928 = vmatpush1.xpose.msra.mxu0 0.0
        %929 = vmatprep.subr.mxu0 0.0
        %930 = vmatpush1.xpose.msra.mxu0 0.0
        %931 = vmatprep.subr.mxu0 0.0
        %932 = vmatpush1.xpose.msra.mxu0 0.0
        %933 = vmatprep.subr.mxu0 0.0
        %934 = vmatpush1.xpose.msra.mxu0 0.0
        %935 = vmatprep.subr.mxu0 0.0
        %936 = vmatpush1.xpose.msra.mxu0 0.0
        %937 = vmatprep.subr.mxu0 0.0
        %938 = vmatpush1.xpose.msra.mxu0 0.0
        %939 = vmatprep.subr.mxu0 0.0
        %940 = vmatpush1.xpose.msra.mxu0 0.0
        %941 = vmatprep.subr.mxu0 0.0
        %942 = vmatpush1.xpose.msra.mxu0 0.0
        %943 = vmatprep.mubr.f32.mxu0 0.0
        %944 = vmatmul.mubr.f32.gmra.mrb[0].mxu0 %v526
        %v945 = vpop.f32.mrb[0].mxu0
        %v946 = vadd.f32 0.0, %v945
        %v947 = vpop.f32.mrb[0].mxu0
        %948 = vmatprep.mubr.f32.mxu0 0.0
        %949 = vmatmul.mubr.f32.gmra.mrb[0].mxu0 %v529
        %v950 = vpop.f32.mrb[0].mxu0
        %v951 = vadd.f32 0.0, %v950
        %v952 = vpop.f32.mrb[0].mxu0
        %953 = vdwg.mxu0
        %v955 = vsel %vm524, %v486, 0
        %v958 = vsel %vm524, %v487, 0
        %960 = vmatprep.subr.mxu0 0.0
        %961 = vmatpush1.xpose.msra.mxu0 %v955
        %962 = vmatprep.subr.mxu0 0.0
        %963 = vmatpush1.xpose.msra.mxu0 %v958
        %964 = vmatprep.subr.mxu0 0.0
        %965 = vmatpush1.xpose.msra.mxu0 0.0
        %966 = vmatprep.subr.mxu0 0.0
        %967 = vmatpush1.xpose.msra.mxu0 0.0
        %968 = vmatprep.subr.mxu0 0.0
        %969 = vmatpush1.xpose.msra.mxu0 0.0
        %970 = vmatprep.subr.mxu0 0.0
        %971 = vmatpush1.xpose.msra.mxu0 0.0
        %972 = vmatprep.subr.mxu0 0.0
        %973 = vmatpush1.xpose.msra.mxu0 0.0
        %974 = vmatprep.subr.mxu0 0.0
        %975 = vmatpush1.xpose.msra.mxu0 0.0
        %976 = vmatprep.subr.mxu0 0.0
        %977 = vmatpush1.xpose.msra.mxu0 0.0
        %978 = vmatprep.subr.mxu0 0.0
        %979 = vmatpush1.xpose.msra.mxu0 0.0
        %980 = vmatprep.subr.mxu0 0.0
        %981 = vmatpush1.xpose.msra.mxu0 0.0
        %982 = vmatprep.subr.mxu0 0.0
        %983 = vmatpush1.xpose.msra.mxu0 0.0
        %984 = vmatprep.subr.mxu0 0.0
        %985 = vmatpush1.xpose.msra.mxu0 0.0
        %986 = vmatprep.subr.mxu0 0.0
        %987 = vmatpush1.xpose.msra.mxu0 0.0
        %988 = vmatprep.subr.mxu0 0.0
        %989 = vmatpush1.xpose.msra.mxu0 0.0
        %990 = vmatprep.subr.mxu0 0.0
        %991 = vmatpush1.xpose.msra.mxu0 0.0
        %992 = vmatprep.subr.mxu0 0.0
        %993 = vmatpush1.xpose.msra.mxu0 0.0
        %994 = vmatprep.subr.mxu0 0.0
        %995 = vmatpush1.xpose.msra.mxu0 0.0
        %996 = vmatprep.subr.mxu0 0.0
        %997 = vmatpush1.xpose.msra.mxu0 0.0
        %998 = vmatprep.subr.mxu0 0.0
        %999 = vmatpush1.xpose.msra.mxu0 0.0
        %1000 = vmatprep.subr.mxu0 0.0
        %1001 = vmatpush1.xpose.msra.mxu0 0.0
        %1002 = vmatprep.subr.mxu0 0.0
        %1003 = vmatpush1.xpose.msra.mxu0 0.0
        %1004 = vmatprep.subr.mxu0 0.0
        %1005 = vmatpush1.xpose.msra.mxu0 0.0
        %1006 = vmatprep.subr.mxu0 0.0
        %1007 = vmatpush1.xpose.msra.mxu0 0.0
        %1008 = vmatprep.subr.mxu0 0.0
        %1009 = vmatpush1.xpose.msra.mxu0 0.0
        %1010 = vmatprep.subr.mxu0 0.0
        %1011 = vmatpush1.xpose.msra.mxu0 0.0
        %1012 = vmatprep.subr.mxu0 0.0
        %1013 = vmatpush1.xpose.msra.mxu0 0.0
        %1014 = vmatprep.subr.mxu0 0.0
        %1015 = vmatpush1.xpose.msra.mxu0 0.0
        %1016 = vmatprep.subr.mxu0 0.0
        %1017 = vmatpush1.xpose.msra.mxu0 0.0
        %1018 = vmatprep.subr.mxu0 0.0
        %1019 = vmatpush1.xpose.msra.mxu0 0.0
        %1020 = vmatprep.subr.mxu0 0.0
        %1021 = vmatpush1.xpose.msra.mxu0 0.0
        %1022 = vmatprep.subr.mxu0 0.0
        %1023 = vmatpush1.xpose.msra.mxu0 0.0
        %1024 = vmatprep.mubr.f32.mxu0 0.0
        %1025 = vmatmul.mubr.f32.gmra.mrb[0].mxu0 %v613
        %v1026 = vpop.f32.mrb[0].mxu0
        %v1027 = vadd.f32 0.0, %v1026
        %v1028 = vpop.f32.mrb[0].mxu0
        %1029 = vmatprep.mubr.f32.mxu0 0.0
        %1030 = vmatmul.mubr.f32.gmra.mrb[0].mxu0 %v616
        %v1031 = vpop.f32.mrb[0].mxu0
        %v1032 = vadd.f32 0.0, %v1031
        %v1033 = vpop.f32.mrb[0].mxu0
        %1034 = vdwg.mxu0
        %v1036 = vsel %vm524, %v504, 0
        %v1039 = vsel %vm524, %v505, 0
        %1041 = vmatprep.subr.mxu0 0.0
        %1042 = vmatpush1.xpose.msra.mxu0 %v1036
        %1043 = vmatprep.subr.mxu0 0.0
        %1044 = vmatpush1.xpose.msra.mxu0 %v1039
        %1045 = vmatprep.subr.mxu0 0.0
        %1046 = vmatpush1.xpose.msra.mxu0 0.0
        %1047 = vmatprep.subr.mxu0 0.0
        %1048 = vmatpush1.xpose.msra.mxu0 0.0
        %1049 = vmatprep.subr.mxu0 0.0
        %1050 = vmatpush1.xpose.msra.mxu0 0.0
        %1051 = vmatprep.subr.mxu0 0.0
        %1052 = vmatpush1.xpose.msra.mxu0 0.0
        %1053 = vmatprep.subr.mxu0 0.0
        %1054 = vmatpush1.xpose.msra.mxu0 0.0
        %1055 = vmatprep.subr.mxu0 0.0
        %1056 = vmatpush1.xpose.msra.mxu0 0.0
        %1057 = vmatprep.subr.mxu0 0.0
        %1058 = vmatpush1.xpose.msra.mxu0 0.0
        %1059 = vmatprep.subr.mxu0 0.0
        %1060 = vmatpush1.xpose.msra.mxu0 0.0
        %1061 = vmatprep.subr.mxu0 0.0
        %1062 = vmatpush1.xpose.msra.mxu0 0.0
        %1063 = vmatprep.subr.mxu0 0.0
        %1064 = vmatpush1.xpose.msra.mxu0 0.0
        %1065 = vmatprep.subr.mxu0 0.0
        %1066 = vmatpush1.xpose.msra.mxu0 0.0
        %1067 = vmatprep.subr.mxu0 0.0
        %1068 = vmatpush1.xpose.msra.mxu0 0.0
        %1069 = vmatprep.subr.mxu0 0.0
        %1070 = vmatpush1.xpose.msra.mxu0 0.0
        %1071 = vmatprep.subr.mxu0 0.0
        %1072 = vmatpush1.xpose.msra.mxu0 0.0
        %1073 = vmatprep.subr.mxu0 0.0
        %1074 = vmatpush1.xpose.msra.mxu0 0.0
        %1075 = vmatprep.subr.mxu0 0.0
        %1076 = vmatpush1.xpose.msra.mxu0 0.0
        %1077 = vmatprep.subr.mxu0 0.0
        %1078 = vmatpush1.xpose.msra.mxu0 0.0
        %1079 = vmatprep.subr.mxu0 0.0
        %1080 = vmatpush1.xpose.msra.mxu0 0.0
        %1081 = vmatprep.subr.mxu0 0.0
        %1082 = vmatpush1.xpose.msra.mxu0 0.0
        %1083 = vmatprep.subr.mxu0 0.0
        %1084 = vmatpush1.xpose.msra.mxu0 0.0
        %1085 = vmatprep.subr.mxu0 0.0
        %1086 = vmatpush1.xpose.msra.mxu0 0.0
        %1087 = vmatprep.subr.mxu0 0.0
        %1088 = vmatpush1.xpose.msra.mxu0 0.0
        %1089 = vmatprep.subr.mxu0 0.0
        %1090 = vmatpush1.xpose.msra.mxu0 0.0
        %1091 = vmatprep.subr.mxu0 0.0
        %1092 = vmatpush1.xpose.msra.mxu0 0.0
        %1093 = vmatprep.subr.mxu0 0.0
        %1094 = vmatpush1.xpose.msra.mxu0 0.0
        %1095 = vmatprep.subr.mxu0 0.0
        %1096 = vmatpush1.xpose.msra.mxu0 0.0
        %1097 = vmatprep.subr.mxu0 0.0
        %1098 = vmatpush1.xpose.msra.mxu0 0.0
        %1099 = vmatprep.subr.mxu0 0.0
        %1100 = vmatpush1.xpose.msra.mxu0 0.0
        %1101 = vmatprep.subr.mxu0 0.0
        %1102 = vmatpush1.xpose.msra.mxu0 0.0
        %1103 = vmatprep.subr.mxu0 0.0
        %1104 = vmatpush1.xpose.msra.mxu0 0.0
        %1105 = vmatprep.mubr.f32.mxu0 0.0
        %1106 = vmatmul.mubr.f32.gmra.mrb[0].mxu0 %v700
        %v1107 = vpop.f32.mrb[0].mxu0
        %v1108 = vadd.f32 0.0, %v1107
        %v1109 = vpop.f32.mrb[0].mxu0
        %1110 = vmatprep.mubr.f32.mxu0 0.0
        %1111 = vmatmul.mubr.f32.gmra.mrb[0].mxu0 %v703
        %v1112 = vpop.f32.mrb[0].mxu0
        %v1113 = vadd.f32 0.0, %v1112
        %v1114 = vpop.f32.mrb[0].mxu0
        %1115 = vdwg.mxu0
        %v1117 = vsel %vm524, %v522, 0
        %v1120 = vsel %vm524, %v523, 0
        %1122 = vmatprep.subr.mxu0 0.0
        %1123 = vmatpush1.xpose.msra.mxu0 %v1117
        %1124 = vmatprep.subr.mxu0 0.0
        %1125 = vmatpush1.xpose.msra.mxu0 %v1120
        %1126 = vmatprep.subr.mxu0 0.0
        %1127 = vmatpush1.xpose.msra.mxu0 0.0
        %1128 = vmatprep.subr.mxu0 0.0
        %1129 = vmatpush1.xpose.msra.mxu0 0.0
        %1130 = vmatprep.subr.mxu0 0.0
        %1131 = vmatpush1.xpose.msra.mxu0 0.0
        %1132 = vmatprep.subr.mxu0 0.0
        %1133 = vmatpush1.xpose.msra.mxu0 0.0
        %1134 = vmatprep.subr.mxu0 0.0
        %1135 = vmatpush1.xpose.msra.mxu0 0.0
        %1136 = vmatprep.subr.mxu0 0.0
        %1137 = vmatpush1.xpose.msra.mxu0 0.0
        %1138 = vmatprep.subr.mxu0 0.0
        %1139 = vmatpush1.xpose.msra.mxu0 0.0
        %1140 = vmatprep.subr.mxu0 0.0
        %1141 = vmatpush1.xpose.msra.mxu0 0.0
        %1142 = vmatprep.subr.mxu0 0.0
        %1143 = vmatpush1.xpose.msra.mxu0 0.0
        %1144 = vmatprep.subr.mxu0 0.0
        %1145 = vmatpush1.xpose.msra.mxu0 0.0
        %1146 = vmatprep.subr.mxu0 0.0
        %1147 = vmatpush1.xpose.msra.mxu0 0.0
        %1148 = vmatprep.subr.mxu0 0.0
        %1149 = vmatpush1.xpose.msra.mxu0 0.0
        %1150 = vmatprep.subr.mxu0 0.0
        %1151 = vmatpush1.xpose.msra.mxu0 0.0
        %1152 = vmatprep.subr.mxu0 0.0
        %1153 = vmatpush1.xpose.msra.mxu0 0.0
        %1154 = vmatprep.subr.mxu0 0.0
        %1155 = vmatpush1.xpose.msra.mxu0 0.0
        %1156 = vmatprep.subr.mxu0 0.0
        %1157 = vmatpush1.xpose.msra.mxu0 0.0
        %1158 = vmatprep.subr.mxu0 0.0
        %1159 = vmatpush1.xpose.msra.mxu0 0.0
        %1160 = vmatprep.subr.mxu0 0.0
        %1161 = vmatpush1.xpose.msra.mxu0 0.0
        %1162 = vmatprep.subr.mxu0 0.0
        %1163 = vmatpush1.xpose.msra.mxu0 0.0
        %1164 = vmatprep.subr.mxu0 0.0
        %1165 = vmatpush1.xpose.msra.mxu0 0.0
        %1166 = vmatprep.subr.mxu0 0.0
        %1167 = vmatpush1.xpose.msra.mxu0 0.0
        %1168 = vmatprep.subr.mxu0 0.0
        %1169 = vmatpush1.xpose.msra.mxu0 0.0
        %1170 = vmatprep.subr.mxu0 0.0
        %1171 = vmatpush1.xpose.msra.mxu0 0.0
        %1172 = vmatprep.subr.mxu0 0.0
        %1173 = vmatpush1.xpose.msra.mxu0 0.0
        %1174 = vmatprep.subr.mxu0 0.0
        %1175 = vmatpush1.xpose.msra.mxu0 0.0
        %1176 = vmatprep.subr.mxu0 0.0
        %1177 = vmatpush1.xpose.msra.mxu0 0.0
        %1178 = vmatprep.subr.mxu0 0.0
        %1179 = vmatpush1.xpose.msra.mxu0 0.0
        %1180 = vmatprep.subr.mxu0 0.0
        %1181 = vmatpush1.xpose.msra.mxu0 0.0
        %1182 = vmatprep.subr.mxu0 0.0
        %1183 = vmatpush1.xpose.msra.mxu0 0.0
        %1184 = vmatprep.subr.mxu0 0.0
        %1185 = vmatpush1.xpose.msra.mxu0 0.0
        %1186 = vmatprep.mubr.f32.mxu0 0.0
        %1187 = vmatmul.mubr.f32.gmra.mrb[0].mxu0 %v787
        %v1188 = vpop.f32.mrb[0].mxu0
        %v1189 = vadd.f32 0.0, %v1188
        %v1190 = vpop.f32.mrb[0].mxu0
        %1191 = vmatprep.mubr.f32.mxu0 0.0
        %1192 = vmatmul.mubr.f32.gmra.mrb[0].mxu0 %v790
        %v1193 = vpop.f32.mrb[0].mxu0
        %v1194 = vadd.f32 0.0, %v1193
        %v1195 = vpop.f32.mrb[0].mxu0
        %1196 = vdwg.mxu0
        %v1198 = vsel %vm524, %v604, 0
        %v1201 = vsel %vm524, %v609, 0
        %1203 = vmatprep.subr.mxu0 0.0
        %1204 = vmatpush1.xpose.msra.mxu0 %v1198
        %1205 = vmatprep.subr.mxu0 0.0
        %1206 = vmatpush1.xpose.msra.mxu0 %v1201
        %1207 = vmatprep.subr.mxu0 0.0
        %1208 = vmatpush1.xpose.msra.mxu0 0.0
        %1209 = vmatprep.subr.mxu0 0.0
        %1210 = vmatpush1.xpose.msra.mxu0 0.0
        %1211 = vmatprep.subr.mxu0 0.0
        %1212 = vmatpush1.xpose.msra.mxu0 0.0
        %1213 = vmatprep.subr.mxu0 0.0
        %1214 = vmatpush1.xpose.msra.mxu0 0.0
        %1215 = vmatprep.subr.mxu0 0.0
        %1216 = vmatpush1.xpose.msra.mxu0 0.0
        %1217 = vmatprep.subr.mxu0 0.0
        %1218 = vmatpush1.xpose.msra.mxu0 0.0
        %1219 = vmatprep.subr.mxu0 0.0
        %1220 = vmatpush1.xpose.msra.mxu0 0.0
        %1221 = vmatprep.subr.mxu0 0.0
        %1222 = vmatpush1.xpose.msra.mxu0 0.0
        %1223 = vmatprep.subr.mxu0 0.0
        %1224 = vmatpush1.xpose.msra.mxu0 0.0
        %1225 = vmatprep.subr.mxu0 0.0
        %1226 = vmatpush1.xpose.msra.mxu0 0.0
        %1227 = vmatprep.subr.mxu0 0.0
        %1228 = vmatpush1.xpose.msra.mxu0 0.0
        %1229 = vmatprep.subr.mxu0 0.0
        %1230 = vmatpush1.xpose.msra.mxu0 0.0
        %1231 = vmatprep.subr.mxu0 0.0
        %1232 = vmatpush1.xpose.msra.mxu0 0.0
        %1233 = vmatprep.subr.mxu0 0.0
        %1234 = vmatpush1.xpose.msra.mxu0 0.0
        %1235 = vmatprep.subr.mxu0 0.0
        %1236 = vmatpush1.xpose.msra.mxu0 0.0
        %1237 = vmatprep.subr.mxu0 0.0
        %1238 = vmatpush1.xpose.msra.mxu0 0.0
        %1239 = vmatprep.subr.mxu0 0.0
        %1240 = vmatpush1.xpose.msra.mxu0 0.0
        %1241 = vmatprep.subr.mxu0 0.0
        %1242 = vmatpush1.xpose.msra.mxu0 0.0
        %1243 = vmatprep.subr.mxu0 0.0
        %1244 = vmatpush1.xpose.msra.mxu0 0.0
        %1245 = vmatprep.subr.mxu0 0.0
        %1246 = vmatpush1.xpose.msra.mxu0 0.0
        %1247 = vmatprep.subr.mxu0 0.0
        %1248 = vmatpush1.xpose.msra.mxu0 0.0
        %1249 = vmatprep.subr.mxu0 0.0
        %1250 = vmatpush1.xpose.msra.mxu0 0.0
        %1251 = vmatprep.subr.mxu0 0.0
        %1252 = vmatpush1.xpose.msra.mxu0 0.0
        %1253 = vmatprep.subr.mxu0 0.0
        %1254 = vmatpush1.xpose.msra.mxu0 0.0
        %1255 = vmatprep.subr.mxu0 0.0
        %1256 = vmatpush1.xpose.msra.mxu0 0.0
        %1257 = vmatprep.subr.mxu0 0.0
        %1258 = vmatpush1.xpose.msra.mxu0 0.0
        %1259 = vmatprep.subr.mxu0 0.0
        %1260 = vmatpush1.xpose.msra.mxu0 0.0
        %1261 = vmatprep.subr.mxu0 0.0
        %1262 = vmatpush1.xpose.msra.mxu0 0.0
        %1263 = vmatprep.subr.mxu0 0.0
        %1264 = vmatpush1.xpose.msra.mxu0 0.0
        %1265 = vmatprep.subr.mxu0 0.0
        %1266 = vmatpush1.xpose.msra.mxu0 0.0
        %1267 = vmatprep.mubr.f32.mxu0 0.0
        %1268 = vmatmul.mubr.f32.gmra.mrb[0].mxu0 %v1198
        %v1269 = vpop.f32.mrb[0].mxu0
        %v1270 = vadd.f32 0.0, %v1269
        %v1271 = vpop.f32.mrb[0].mxu0
        %1272 = vmatprep.mubr.f32.mxu0 0.0
        %1273 = vmatmul.mubr.f32.gmra.mrb[0].mxu0 %v1201
        %v1274 = vpop.f32.mrb[0].mxu0
        %v1275 = vadd.f32 0.0, %v1274
        %v1276 = vpop.f32.mrb[0].mxu0
        %1277 = vdwg.mxu0
        %v1279 = vsel %vm524, %v691, 0
        %v1282 = vsel %vm524, %v696, 0
        %1284 = vmatprep.subr.mxu0 0.0
        %1285 = vmatpush1.xpose.msra.mxu0 %v1279
        %1286 = vmatprep.subr.mxu0 0.0
        %1287 = vmatpush1.xpose.msra.mxu0 %v1282
        %1288 = vmatprep.subr.mxu0 0.0
        %1289 = vmatpush1.xpose.msra.mxu0 0.0
        %1290 = vmatprep.subr.mxu0 0.0
        %1291 = vmatpush1.xpose.msra.mxu0 0.0
        %1292 = vmatprep.subr.mxu0 0.0
        %1293 = vmatpush1.xpose.msra.mxu0 0.0
        %1294 = vmatprep.subr.mxu0 0.0
        %1295 = vmatpush1.xpose.msra.mxu0 0.0
        %1296 = vmatprep.subr.mxu0 0.0
        %1297 = vmatpush1.xpose.msra.mxu0 0.0
        %1298 = vmatprep.subr.mxu0 0.0
        %1299 = vmatpush1.xpose.msra.mxu0 0.0
        %1300 = vmatprep.subr.mxu0 0.0
        %1301 = vmatpush1.xpose.msra.mxu0 0.0
        %1302 = vmatprep.subr.mxu0 0.0
        %1303 = vmatpush1.xpose.msra.mxu0 0.0
        %1304 = vmatprep.subr.mxu0 0.0
        %1305 = vmatpush1.xpose.msra.mxu0 0.0
        %1306 = vmatprep.subr.mxu0 0.0
        %1307 = vmatpush1.xpose.msra.mxu0 0.0
        %1308 = vmatprep.subr.mxu0 0.0
        %1309 = vmatpush1.xpose.msra.mxu0 0.0
        %1310 = vmatprep.subr.mxu0 0.0
        %1311 = vmatpush1.xpose.msra.mxu0 0.0
        %1312 = vmatprep.subr.mxu0 0.0
        %1313 = vmatpush1.xpose.msra.mxu0 0.0
        %1314 = vmatprep.subr.mxu0 0.0
        %1315 = vmatpush1.xpose.msra.mxu0 0.0
        %1316 = vmatprep.subr.mxu0 0.0
        %1317 = vmatpush1.xpose.msra.mxu0 0.0
        %1318 = vmatprep.subr.mxu0 0.0
        %1319 = vmatpush1.xpose.msra.mxu0 0.0
        %1320 = vmatprep.subr.mxu0 0.0
        %1321 = vmatpush1.xpose.msra.mxu0 0.0
        %1322 = vmatprep.subr.mxu0 0.0
        %1323 = vmatpush1.xpose.msra.mxu0 0.0
        %1324 = vmatprep.subr.mxu0 0.0
        %1325 = vmatpush1.xpose.msra.mxu0 0.0
        %1326 = vmatprep.subr.mxu0 0.0
        %1327 = vmatpush1.xpose.msra.mxu0 0.0
        %1328 = vmatprep.subr.mxu0 0.0
        %1329 = vmatpush1.xpose.msra.mxu0 0.0
        %1330 = vmatprep.subr.mxu0 0.0
        %1331 = vmatpush1.xpose.msra.mxu0 0.0
        %1332 = vmatprep.subr.mxu0 0.0
        %1333 = vmatpush1.xpose.msra.mxu0 0.0
        %1334 = vmatprep.subr.mxu0 0.0
        %1335 = vmatpush1.xpose.msra.mxu0 0.0
        %1336 = vmatprep.subr.mxu0 0.0
        %1337 = vmatpush1.xpose.msra.mxu0 0.0
        %1338 = vmatprep.subr.mxu0 0.0
        %1339 = vmatpush1.xpose.msra.mxu0 0.0
        %1340 = vmatprep.subr.mxu0 0.0
        %1341 = vmatpush1.xpose.msra.mxu0 0.0
        %1342 = vmatprep.subr.mxu0 0.0
        %1343 = vmatpush1.xpose.msra.mxu0 0.0
        %1344 = vmatprep.subr.mxu0 0.0
        %1345 = vmatpush1.xpose.msra.mxu0 0.0
        %1346 = vmatprep.subr.mxu0 0.0
        %1347 = vmatpush1.xpose.msra.mxu0 0.0
        %1348 = vmatprep.mubr.f32.mxu0 0.0
        %1349 = vmatmul.mubr.f32.gmra.mrb[0].mxu0 %v1279
        %v1350 = vpop.f32.mrb[0].mxu0
        %v1351 = vadd.f32 0.0, %v1350
        %v1352 = vpop.f32.mrb[0].mxu0
        %1353 = vmatprep.mubr.f32.mxu0 0.0
        %1354 = vmatmul.mubr.f32.gmra.mrb[0].mxu0 %v1282
        %v1355 = vpop.f32.mrb[0].mxu0
        %v1356 = vadd.f32 0.0, %v1355
        %v1357 = vpop.f32.mrb[0].mxu0
        %1358 = vdwg.mxu0
        %v1360 = vsel %vm524, %v778, 0
        %v1363 = vsel %vm524, %v783, 0
        %1365 = vmatprep.subr.mxu0 0.0
        %1366 = vmatpush1.xpose.msra.mxu0 %v1360
        %1367 = vmatprep.subr.mxu0 0.0
        %1368 = vmatpush1.xpose.msra.mxu0 %v1363
        %1369 = vmatprep.subr.mxu0 0.0
        %1370 = vmatpush1.xpose.msra.mxu0 0.0
        %1371 = vmatprep.subr.mxu0 0.0
        %1372 = vmatpush1.xpose.msra.mxu0 0.0
        %1373 = vmatprep.subr.mxu0 0.0
        %1374 = vmatpush1.xpose.msra.mxu0 0.0
        %1375 = vmatprep.subr.mxu0 0.0
        %1376 = vmatpush1.xpose.msra.mxu0 0.0
        %1377 = vmatprep.subr.mxu0 0.0
        %1378 = vmatpush1.xpose.msra.mxu0 0.0
        %1379 = vmatprep.subr.mxu0 0.0
        %1380 = vmatpush1.xpose.msra.mxu0 0.0
        %1381 = vmatprep.subr.mxu0 0.0
        %1382 = vmatpush1.xpose.msra.mxu0 0.0
        %1383 = vmatprep.subr.mxu0 0.0
        %1384 = vmatpush1.xpose.msra.mxu0 0.0
        %1385 = vmatprep.subr.mxu0 0.0
        %1386 = vmatpush1.xpose.msra.mxu0 0.0
        %1387 = vmatprep.subr.mxu0 0.0
        %1388 = vmatpush1.xpose.msra.mxu0 0.0
        %1389 = vmatprep.subr.mxu0 0.0
        %1390 = vmatpush1.xpose.msra.mxu0 0.0
        %1391 = vmatprep.subr.mxu0 0.0
        %1392 = vmatpush1.xpose.msra.mxu0 0.0
        %1393 = vmatprep.subr.mxu0 0.0
        %1394 = vmatpush1.xpose.msra.mxu0 0.0
        %1395 = vmatprep.subr.mxu0 0.0
        %1396 = vmatpush1.xpose.msra.mxu0 0.0
        %1397 = vmatprep.subr.mxu0 0.0
        %1398 = vmatpush1.xpose.msra.mxu0 0.0
        %1399 = vmatprep.subr.mxu0 0.0
        %1400 = vmatpush1.xpose.msra.mxu0 0.0
        %1401 = vmatprep.subr.mxu0 0.0
        %1402 = vmatpush1.xpose.msra.mxu0 0.0
        %1403 = vmatprep.subr.mxu0 0.0
        %1404 = vmatpush1.xpose.msra.mxu0 0.0
        %1405 = vmatprep.subr.mxu0 0.0
        %1406 = vmatpush1.xpose.msra.mxu0 0.0
        %1407 = vmatprep.subr.mxu0 0.0
        %1408 = vmatpush1.xpose.msra.mxu0 0.0
        %1409 = vmatprep.subr.mxu0 0.0
        %1410 = vmatpush1.xpose.msra.mxu0 0.0
        %1411 = vmatprep.subr.mxu0 0.0
        %1412 = vmatpush1.xpose.msra.mxu0 0.0
        %1413 = vmatprep.subr.mxu0 0.0
        %1414 = vmatpush1.xpose.msra.mxu0 0.0
        %1415 = vmatprep.subr.mxu0 0.0
        %1416 = vmatpush1.xpose.msra.mxu0 0.0
        %1417 = vmatprep.subr.mxu0 0.0
        %1418 = vmatpush1.xpose.msra.mxu0 0.0
        %1419 = vmatprep.subr.mxu0 0.0
        %1420 = vmatpush1.xpose.msra.mxu0 0.0
        %1421 = vmatprep.subr.mxu0 0.0
        %1422 = vmatpush1.xpose.msra.mxu0 0.0
        %1423 = vmatprep.subr.mxu0 0.0
        %1424 = vmatpush1.xpose.msra.mxu0 0.0
        %1425 = vmatprep.subr.mxu0 0.0
        %1426 = vmatpush1.xpose.msra.mxu0 0.0
        %1427 = vmatprep.subr.mxu0 0.0
        %1428 = vmatpush1.xpose.msra.mxu0 0.0
        %1429 = vmatprep.mubr.f32.mxu0 0.0
        %1430 = vmatmul.mubr.f32.gmra.mrb[0].mxu0 %v1360
        %v1431 = vpop.f32.mrb[0].mxu0
        %v1432 = vadd.f32 0.0, %v1431
        %v1433 = vpop.f32.mrb[0].mxu0
        %1434 = vmatprep.mubr.f32.mxu0 0.0
        %1435 = vmatmul.mubr.f32.gmra.mrb[0].mxu0 %v1363
        %v1436 = vpop.f32.mrb[0].mxu0
        %v1437 = vadd.f32 0.0, %v1436
        %v1438 = vpop.f32.mrb[0].mxu0
        %1439 = vdwg.mxu0
        %v1441 = vsel %vm524, %v865, 0
        %v1444 = vsel %vm524, %v870, 0
        %1446 = vmatprep.subr.mxu0 0.0
        %1447 = vmatpush1.xpose.msra.mxu0 %v1441
        %1448 = vmatprep.subr.mxu0 0.0
        %1449 = vmatpush1.xpose.msra.mxu0 %v1444
        %1450 = vmatprep.subr.mxu0 0.0
        %1451 = vmatpush1.xpose.msra.mxu0 0.0
        %1452 = vmatprep.subr.mxu0 0.0
        %1453 = vmatpush1.xpose.msra.mxu0 0.0
        %1454 = vmatprep.subr.mxu0 0.0
        %1455 = vmatpush1.xpose.msra.mxu0 0.0
        %1456 = vmatprep.subr.mxu0 0.0
        %1457 = vmatpush1.xpose.msra.mxu0 0.0
        %1458 = vmatprep.subr.mxu0 0.0
        %1459 = vmatpush1.xpose.msra.mxu0 0.0
        %1460 = vmatprep.subr.mxu0 0.0
        %1461 = vmatpush1.xpose.msra.mxu0 0.0
        %1462 = vmatprep.subr.mxu0 0.0
        %1463 = vmatpush1.xpose.msra.mxu0 0.0
        %1464 = vmatprep.subr.mxu0 0.0
        %1465 = vmatpush1.xpose.msra.mxu0 0.0
        %1466 = vmatprep.subr.mxu0 0.0
        %1467 = vmatpush1.xpose.msra.mxu0 0.0
        %1468 = vmatprep.subr.mxu0 0.0
        %1469 = vmatpush1.xpose.msra.mxu0 0.0
        %1470 = vmatprep.subr.mxu0 0.0
        %1471 = vmatpush1.xpose.msra.mxu0 0.0
        %1472 = vmatprep.subr.mxu0 0.0
        %1473 = vmatpush1.xpose.msra.mxu0 0.0
        %1474 = vmatprep.subr.mxu0 0.0
        %1475 = vmatpush1.xpose.msra.mxu0 0.0
        %1476 = vmatprep.subr.mxu0 0.0
        %1477 = vmatpush1.xpose.msra.mxu0 0.0
        %1478 = vmatprep.subr.mxu0 0.0
        %1479 = vmatpush1.xpose.msra.mxu0 0.0
        %1480 = vmatprep.subr.mxu0 0.0
        %1481 = vmatpush1.xpose.msra.mxu0 0.0
        %1482 = vmatprep.subr.mxu0 0.0
        %1483 = vmatpush1.xpose.msra.mxu0 0.0
        %1484 = vmatprep.subr.mxu0 0.0
        %1485 = vmatpush1.xpose.msra.mxu0 0.0
        %1486 = vmatprep.subr.mxu0 0.0
        %1487 = vmatpush1.xpose.msra.mxu0 0.0
        %1488 = vmatprep.subr.mxu0 0.0
        %1489 = vmatpush1.xpose.msra.mxu0 0.0
        %1490 = vmatprep.subr.mxu0 0.0
        %1491 = vmatpush1.xpose.msra.mxu0 0.0
        %1492 = vmatprep.subr.mxu0 0.0
        %1493 = vmatpush1.xpose.msra.mxu0 0.0
        %1494 = vmatprep.subr.mxu0 0.0
        %1495 = vmatpush1.xpose.msra.mxu0 0.0
        %1496 = vmatprep.subr.mxu0 0.0
        %1497 = vmatpush1.xpose.msra.mxu0 0.0
        %1498 = vmatprep.subr.mxu0 0.0
        %1499 = vmatpush1.xpose.msra.mxu0 0.0
        %1500 = vmatprep.subr.mxu0 0.0
        %1501 = vmatpush1.xpose.msra.mxu0 0.0
        %1502 = vmatprep.subr.mxu0 0.0
        %1503 = vmatpush1.xpose.msra.mxu0 0.0
        %1504 = vmatprep.subr.mxu0 0.0
        %1505 = vmatpush1.xpose.msra.mxu0 0.0
        %1506 = vmatprep.subr.mxu0 0.0
        %1507 = vmatpush1.xpose.msra.mxu0 0.0
        %1508 = vmatprep.subr.mxu0 0.0
        %1509 = vmatpush1.xpose.msra.mxu0 0.0
        %1510 = vmatprep.mubr.f32.mxu0 0.0
        %1511 = vmatmul.mubr.f32.gmra.mrb[0].mxu0 %v1441
        %v1512 = vpop.f32.mrb[0].mxu0
        %v1513 = vadd.f32 0.0, %v1512
        %v1514 = vpop.f32.mrb[0].mxu0
        %1515 = vmatprep.mubr.f32.mxu0 0.0
        %1516 = vmatmul.mubr.f32.gmra.mrb[0].mxu0 %v1444
        %v1517 = vpop.f32.mrb[0].mxu0
        %v1518 = vadd.f32 0.0, %v1517
        %v1519 = vpop.f32.mrb[0].mxu0
        %1520 = vdwg.mxu0
        %v1522 = vsel %vm524, %v946, 0
        %v1525 = vsel %vm524, %v951, 0
        %1527 = vmatprep.subr.mxu0 0.0
        %1528 = vmatpush1.xpose.msra.mxu0 %v1522
        %1529 = vmatprep.subr.mxu0 0.0
        %1530 = vmatpush1.xpose.msra.mxu0 %v1525
        %1531 = vmatprep.subr.mxu0 0.0
        %1532 = vmatpush1.xpose.msra.mxu0 0.0
        %1533 = vmatprep.subr.mxu0 0.0
        %1534 = vmatpush1.xpose.msra.mxu0 0.0
        %1535 = vmatprep.subr.mxu0 0.0
        %1536 = vmatpush1.xpose.msra.mxu0 0.0
        %1537 = vmatprep.subr.mxu0 0.0
        %1538 = vmatpush1.xpose.msra.mxu0 0.0
        %1539 = vmatprep.subr.mxu0 0.0
        %1540 = vmatpush1.xpose.msra.mxu0 0.0
        %1541 = vmatprep.subr.mxu0 0.0
        %1542 = vmatpush1.xpose.msra.mxu0 0.0
        %1543 = vmatprep.subr.mxu0 0.0
        %1544 = vmatpush1.xpose.msra.mxu0 0.0
        %1545 = vmatprep.subr.mxu0 0.0
        %1546 = vmatpush1.xpose.msra.mxu0 0.0
        %1547 = vmatprep.subr.mxu0 0.0
        %1548 = vmatpush1.xpose.msra.mxu0 0.0
        %1549 = vmatprep.subr.mxu0 0.0
        %1550 = vmatpush1.xpose.msra.mxu0 0.0
        %1551 = vmatprep.subr.mxu0 0.0
        %1552 = vmatpush1.xpose.msra.mxu0 0.0
        %1553 = vmatprep.subr.mxu0 0.0
        %1554 = vmatpush1.xpose.msra.mxu0 0.0
        %1555 = vmatprep.subr.mxu0 0.0
        %1556 = vmatpush1.xpose.msra.mxu0 0.0
        %1557 = vmatprep.subr.mxu0 0.0
        %1558 = vmatpush1.xpose.msra.mxu0 0.0
        %1559 = vmatprep.subr.mxu0 0.0
        %1560 = vmatpush1.xpose.msra.mxu0 0.0
        %1561 = vmatprep.subr.mxu0 0.0
        %1562 = vmatpush1.xpose.msra.mxu0 0.0
        %1563 = vmatprep.subr.mxu0 0.0
        %1564 = vmatpush1.xpose.msra.mxu0 0.0
        %1565 = vmatprep.subr.mxu0 0.0
        %1566 = vmatpush1.xpose.msra.mxu0 0.0
        %1567 = vmatprep.subr.mxu0 0.0
        %1568 = vmatpush1.xpose.msra.mxu0 0.0
        %1569 = vmatprep.subr.mxu0 0.0
        %1570 = vmatpush1.xpose.msra.mxu0 0.0
        %1571 = vmatprep.subr.mxu0 0.0
        %1572 = vmatpush1.xpose.msra.mxu0 0.0
        %1573 = vmatprep.subr.mxu0 0.0
        %1574 = vmatpush1.xpose.msra.mxu0 0.0
        %1575 = vmatprep.subr.mxu0 0.0
        %1576 = vmatpush1.xpose.msra.mxu0 0.0
        %1577 = vmatprep.subr.mxu0 0.0
        %1578 = vmatpush1.xpose.msra.mxu0 0.0
        %1579 = vmatprep.subr.mxu0 0.0
        %1580 = vmatpush1.xpose.msra.mxu0 0.0
        %1581 = vmatprep.subr.mxu0 0.0
        %1582 = vmatpush1.xpose.msra.mxu0 0.0
        %1583 = vmatprep.subr.mxu0 0.0
        %1584 = vmatpush1.xpose.msra.mxu0 0.0
        %1585 = vmatprep.subr.mxu0 0.0
        %1586 = vmatpush1.xpose.msra.mxu0 0.0
        %1587 = vmatprep.subr.mxu0 0.0
        %1588 = vmatpush1.xpose.msra.mxu0 0.0
        %1589 = vmatprep.subr.mxu0 0.0
        %1590 = vmatpush1.xpose.msra.mxu0 0.0
        %1591 = vmatprep.mubr.f32.mxu0 0.0
        %1592 = vmatmul.mubr.f32.gmra.mrb[0].mxu0 %v1522
        %v1593 = vpop.f32.mrb[0].mxu0
        %v1594 = vadd.f32 0.0, %v1593
        %v1595 = vpop.f32.mrb[0].mxu0
        %1596 = vmatprep.mubr.f32.mxu0 0.0
        %1597 = vmatmul.mubr.f32.gmra.mrb[0].mxu0 %v1525
        %v1598 = vpop.f32.mrb[0].mxu0
        %v1599 = vadd.f32 0.0, %v1598
        %v1600 = vpop.f32.mrb[0].mxu0
        %1601 = vdwg.mxu0
        %v1603 = vsel %vm524, %v1027, 0
        %v1606 = vsel %vm524, %v1032, 0
        %1608 = vmatprep.subr.mxu0 0.0
        %1609 = vmatpush1.xpose.msra.mxu0 %v1603
        %1610 = vmatprep.subr.mxu0 0.0
        %1611 = vmatpush1.xpose.msra.mxu0 %v1606
        %1612 = vmatprep.subr.mxu0 0.0
        %1613 = vmatpush1.xpose.msra.mxu0 0.0
        %1614 = vmatprep.subr.mxu0 0.0
        %1615 = vmatpush1.xpose.msra.mxu0 0.0
        %1616 = vmatprep.subr.mxu0 0.0
        %1617 = vmatpush1.xpose.msra.mxu0 0.0
        %1618 = vmatprep.subr.mxu0 0.0
        %1619 = vmatpush1.xpose.msra.mxu0 0.0
        %1620 = vmatprep.subr.mxu0 0.0
        %1621 = vmatpush1.xpose.msra.mxu0 0.0
        %1622 = vmatprep.subr.mxu0 0.0
        %1623 = vmatpush1.xpose.msra.mxu0 0.0
        %1624 = vmatprep.subr.mxu0 0.0
        %1625 = vmatpush1.xpose.msra.mxu0 0.0
        %1626 = vmatprep.subr.mxu0 0.0
        %1627 = vmatpush1.xpose.msra.mxu0 0.0
        %1628 = vmatprep.subr.mxu0 0.0
        %1629 = vmatpush1.xpose.msra.mxu0 0.0
        %1630 = vmatprep.subr.mxu0 0.0
        %1631 = vmatpush1.xpose.msra.mxu0 0.0
        %1632 = vmatprep.subr.mxu0 0.0
        %1633 = vmatpush1.xpose.msra.mxu0 0.0
        %1634 = vmatprep.subr.mxu0 0.0
        %1635 = vmatpush1.xpose.msra.mxu0 0.0
        %1636 = vmatprep.subr.mxu0 0.0
        %1637 = vmatpush1.xpose.msra.mxu0 0.0
        %1638 = vmatprep.subr.mxu0 0.0
        %1639 = vmatpush1.xpose.msra.mxu0 0.0
        %1640 = vmatprep.subr.mxu0 0.0
        %1641 = vmatpush1.xpose.msra.mxu0 0.0
        %1642 = vmatprep.subr.mxu0 0.0
        %1643 = vmatpush1.xpose.msra.mxu0 0.0
        %1644 = vmatprep.subr.mxu0 0.0
        %1645 = vmatpush1.xpose.msra.mxu0 0.0
        %1646 = vmatprep.subr.mxu0 0.0
        %1647 = vmatpush1.xpose.msra.mxu0 0.0
        %1648 = vmatprep.subr.mxu0 0.0
        %1649 = vmatpush1.xpose.msra.mxu0 0.0
        %1650 = vmatprep.subr.mxu0 0.0
        %1651 = vmatpush1.xpose.msra.mxu0 0.0
        %1652 = vmatprep.subr.mxu0 0.0
        %1653 = vmatpush1.xpose.msra.mxu0 0.0
        %1654 = vmatprep.subr.mxu0 0.0
        %1655 = vmatpush1.xpose.msra.mxu0 0.0
        %1656 = vmatprep.subr.mxu0 0.0
        %1657 = vmatpush1.xpose.msra.mxu0 0.0
        %1658 = vmatprep.subr.mxu0 0.0
        %1659 = vmatpush1.xpose.msra.mxu0 0.0
        %1660 = vmatprep.subr.mxu0 0.0
        %1661 = vmatpush1.xpose.msra.mxu0 0.0
        %1662 = vmatprep.subr.mxu0 0.0
        %1663 = vmatpush1.xpose.msra.mxu0 0.0
        %1664 = vmatprep.subr.mxu0 0.0
        %1665 = vmatpush1.xpose.msra.mxu0 0.0
        %1666 = vmatprep.subr.mxu0 0.0
        %1667 = vmatpush1.xpose.msra.mxu0 0.0
        %1668 = vmatprep.subr.mxu0 0.0
        %1669 = vmatpush1.xpose.msra.mxu0 0.0
        %1670 = vmatprep.subr.mxu0 0.0
        %1671 = vmatpush1.xpose.msra.mxu0 0.0
        %1672 = vmatprep.mubr.f32.mxu0 0.0
        %1673 = vmatmul.mubr.f32.gmra.mrb[0].mxu0 %v1603
        %v1674 = vpop.f32.mrb[0].mxu0
        %v1675 = vadd.f32 0.0, %v1674
        %v1676 = vpop.f32.mrb[0].mxu0
        %1677 = vmatprep.mubr.f32.mxu0 0.0
        %1678 = vmatmul.mubr.f32.gmra.mrb[0].mxu0 %v1606
        %v1679 = vpop.f32.mrb[0].mxu0
        %v1680 = vadd.f32 0.0, %v1679
        %v1681 = vpop.f32.mrb[0].mxu0
        %1682 = vdwg.mxu0
        %v1684 = vsel %vm524, %v1108, 0
        %v1687 = vsel %vm524, %v1113, 0
        %1689 = vmatprep.subr.mxu0 0.0
        %1690 = vmatpush1.xpose.msra.mxu0 %v1684
        %1691 = vmatprep.subr.mxu0 0.0
        %1692 = vmatpush1.xpose.msra.mxu0 %v1687
        %1693 = vmatprep.subr.mxu0 0.0
        %1694 = vmatpush1.xpose.msra.mxu0 0.0
        %1695 = vmatprep.subr.mxu0 0.0
        %1696 = vmatpush1.xpose.msra.mxu0 0.0
        %1697 = vmatprep.subr.mxu0 0.0
        %1698 = vmatpush1.xpose.msra.mxu0 0.0
        %1699 = vmatprep.subr.mxu0 0.0
        %1700 = vmatpush1.xpose.msra.mxu0 0.0
        %1701 = vmatprep.subr.mxu0 0.0
        %1702 = vmatpush1.xpose.msra.mxu0 0.0
        %1703 = vmatprep.subr.mxu0 0.0
        %1704 = vmatpush1.xpose.msra.mxu0 0.0
        %1705 = vmatprep.subr.mxu0 0.0
        %1706 = vmatpush1.xpose.msra.mxu0 0.0
        %1707 = vmatprep.subr.mxu0 0.0
        %1708 = vmatpush1.xpose.msra.mxu0 0.0
        %1709 = vmatprep.subr.mxu0 0.0
        %1710 = vmatpush1.xpose.msra.mxu0 0.0
        %1711 = vmatprep.subr.mxu0 0.0
        %1712 = vmatpush1.xpose.msra.mxu0 0.0
        %1713 = vmatprep.subr.mxu0 0.0
        %1714 = vmatpush1.xpose.msra.mxu0 0.0
        %1715 = vmatprep.subr.mxu0 0.0
        %1716 = vmatpush1.xpose.msra.mxu0 0.0
        %1717 = vmatprep.subr.mxu0 0.0
        %1718 = vmatpush1.xpose.msra.mxu0 0.0
        %1719 = vmatprep.subr.mxu0 0.0
        %1720 = vmatpush1.xpose.msra.mxu0 0.0
        %1721 = vmatprep.subr.mxu0 0.0
        %1722 = vmatpush1.xpose.msra.mxu0 0.0
        %1723 = vmatprep.subr.mxu0 0.0
        %1724 = vmatpush1.xpose.msra.mxu0 0.0
        %1725 = vmatprep.subr.mxu0 0.0
        %1726 = vmatpush1.xpose.msra.mxu0 0.0
        %1727 = vmatprep.subr.mxu0 0.0
        %1728 = vmatpush1.xpose.msra.mxu0 0.0
        %1729 = vmatprep.subr.mxu0 0.0
        %1730 = vmatpush1.xpose.msra.mxu0 0.0
        %1731 = vmatprep.subr.mxu0 0.0
        %1732 = vmatpush1.xpose.msra.mxu0 0.0
        %1733 = vmatprep.subr.mxu0 0.0
        %1734 = vmatpush1.xpose.msra.mxu0 0.0
        %1735 = vmatprep.subr.mxu0 0.0
        %1736 = vmatpush1.xpose.msra.mxu0 0.0
        %1737 = vmatprep.subr.mxu0 0.0
        %1738 = vmatpush1.xpose.msra.mxu0 0.0
        %1739 = vmatprep.subr.mxu0 0.0
        %1740 = vmatpush1.xpose.msra.mxu0 0.0
        %1741 = vmatprep.subr.mxu0 0.0
        %1742 = vmatpush1.xpose.msra.mxu0 0.0
        %1743 = vmatprep.subr.mxu0 0.0
        %1744 = vmatpush1.xpose.msra.mxu0 0.0
        %1745 = vmatprep.subr.mxu0 0.0
        %1746 = vmatpush1.xpose.msra.mxu0 0.0
        %1747 = vmatprep.subr.mxu0 0.0
        %1748 = vmatpush1.xpose.msra.mxu0 0.0
        %1749 = vmatprep.subr.mxu0 0.0
        %1750 = vmatpush1.xpose.msra.mxu0 0.0
        %1751 = vmatprep.subr.mxu0 0.0
        %1752 = vmatpush1.xpose.msra.mxu0 0.0
        %1753 = vmatprep.mubr.f32.mxu0 0.0
        %1754 = vmatmul.mubr.f32.gmra.mrb[0].mxu0 %v1684
        %v1755 = vpop.f32.mrb[0].mxu0
        %v1756 = vadd.f32 0.0, %v1755
        %v1757 = vpop.f32.mrb[0].mxu0
        %1758 = vmatprep.mubr.f32.mxu0 0.0
        %1759 = vmatmul.mubr.f32.gmra.mrb[0].mxu0 %v1687
        %v1760 = vpop.f32.mrb[0].mxu0
        %v1761 = vadd.f32 0.0, %v1760
        %v1762 = vpop.f32.mrb[0].mxu0
        %1763 = vdwg.mxu0
        %v1765 = vsel %vm524, %v1189, 0
        %v1768 = vsel %vm524, %v1194, 0
        %1770 = vmatprep.subr.mxu0 0.0
        %1771 = vmatpush1.xpose.msra.mxu0 %v1765
        %1772 = vmatprep.subr.mxu0 0.0
        %1773 = vmatpush1.xpose.msra.mxu0 %v1768
        %1774 = vmatprep.subr.mxu0 0.0
        %1775 = vmatpush1.xpose.msra.mxu0 0.0
        %1776 = vmatprep.subr.mxu0 0.0
        %1777 = vmatpush1.xpose.msra.mxu0 0.0
        %1778 = vmatprep.subr.mxu0 0.0
        %1779 = vmatpush1.xpose.msra.mxu0 0.0
        %1780 = vmatprep.subr.mxu0 0.0
        %1781 = vmatpush1.xpose.msra.mxu0 0.0
        %1782 = vmatprep.subr.mxu0 0.0
        %1783 = vmatpush1.xpose.msra.mxu0 0.0
        %1784 = vmatprep.subr.mxu0 0.0
        %1785 = vmatpush1.xpose.msra.mxu0 0.0
        %1786 = vmatprep.subr.mxu0 0.0
        %1787 = vmatpush1.xpose.msra.mxu0 0.0
        %1788 = vmatprep.subr.mxu0 0.0
        %1789 = vmatpush1.xpose.msra.mxu0 0.0
        %1790 = vmatprep.subr.mxu0 0.0
        %1791 = vmatpush1.xpose.msra.mxu0 0.0
        %1792 = vmatprep.subr.mxu0 0.0
        %1793 = vmatpush1.xpose.msra.mxu0 0.0
        %1794 = vmatprep.subr.mxu0 0.0
        %1795 = vmatpush1.xpose.msra.mxu0 0.0
        %1796 = vmatprep.subr.mxu0 0.0
        %1797 = vmatpush1.xpose.msra.mxu0 0.0
        %1798 = vmatprep.subr.mxu0 0.0
        %1799 = vmatpush1.xpose.msra.mxu0 0.0
        %1800 = vmatprep.subr.mxu0 0.0
        %1801 = vmatpush1.xpose.msra.mxu0 0.0
        %1802 = vmatprep.subr.mxu0 0.0
        %1803 = vmatpush1.xpose.msra.mxu0 0.0
        %1804 = vmatprep.subr.mxu0 0.0
        %1805 = vmatpush1.xpose.msra.mxu0 0.0
        %1806 = vmatprep.subr.mxu0 0.0
        %1807 = vmatpush1.xpose.msra.mxu0 0.0
        %1808 = vmatprep.subr.mxu0 0.0
        %1809 = vmatpush1.xpose.msra.mxu0 0.0
        %1810 = vmatprep.subr.mxu0 0.0
        %1811 = vmatpush1.xpose.msra.mxu0 0.0
        %1812 = vmatprep.subr.mxu0 0.0
        %1813 = vmatpush1.xpose.msra.mxu0 0.0
        %1814 = vmatprep.subr.mxu0 0.0
        %1815 = vmatpush1.xpose.msra.mxu0 0.0
        %1816 = vmatprep.subr.mxu0 0.0
        %1817 = vmatpush1.xpose.msra.mxu0 0.0
        %1818 = vmatprep.subr.mxu0 0.0
        %1819 = vmatpush1.xpose.msra.mxu0 0.0
        %1820 = vmatprep.subr.mxu0 0.0
        %1821 = vmatpush1.xpose.msra.mxu0 0.0
        %1822 = vmatprep.subr.mxu0 0.0
        %1823 = vmatpush1.xpose.msra.mxu0 0.0
        %1824 = vmatprep.subr.mxu0 0.0
        %1825 = vmatpush1.xpose.msra.mxu0 0.0
        %1826 = vmatprep.subr.mxu0 0.0
        %1827 = vmatpush1.xpose.msra.mxu0 0.0
        %1828 = vmatprep.subr.mxu0 0.0
        %1829 = vmatpush1.xpose.msra.mxu0 0.0
        %1830 = vmatprep.subr.mxu0 0.0
        %1831 = vmatpush1.xpose.msra.mxu0 0.0
        %1832 = vmatprep.subr.mxu0 0.0
        %1833 = vmatpush1.xpose.msra.mxu0 0.0
        %1834 = vmatprep.mubr.f32.mxu0 0.0
        %1835 = vmatmul.mubr.f32.gmra.mrb[0].mxu0 %v1765
        %v1836 = vpop.f32.mrb[0].mxu0
        %v1837 = vadd.f32 0.0, %v1836
        %v1838 = vpop.f32.mrb[0].mxu0
        %1839 = vmatprep.mubr.f32.mxu0 0.0
        %1840 = vmatmul.mubr.f32.gmra.mrb[0].mxu0 %v1768
        %v1841 = vpop.f32.mrb[0].mxu0
        %v1842 = vadd.f32 0.0, %v1841
        %v1843 = vpop.f32.mrb[0].mxu0
        %1844 = vdwg.mxu0
        %v1845 = vsel %vm524, %v1270, -inf
        %v1846 = vsel %vm524, %v1351, -inf
        %v1847 = vsel %vm524, %v1432, -inf
        %v1848 = vmax.f32 %v1845, %v1847
        %v1849 = vsel %vm524, %v1513, -inf
        %v1850 = vmax.f32 %v1846, %v1849
        %v1851 = vmax.f32 %v1848, %v1850
        %v1852 = vsel %vm524, %v1275, -inf
        %v1853 = vsel %vm524, %v1356, -inf
        %v1854 = vsel %vm524, %v1437, -inf
        %v1855 = vmax.f32 %v1852, %v1854
        %v1856 = vsel %vm524, %v1518, -inf
        %v1857 = vmax.f32 %v1853, %v1856
        %v1858 = vmax.f32 %v1855, %v1857
        %v1859 = vsub.f32 %v1270, %v1851
        %v1860 = vsub.f32 %v1275, %v1858
        %v1861 = vsub.f32 %v1351, %v1851
        %v1862 = vsub.f32 %v1356, %v1858
        %v1863 = vsub.f32 %v1432, %v1851
        %v1864 = vsub.f32 %v1437, %v1858
        %v1865 = vsub.f32 %v1513, %v1851
        %v1866 = vsub.f32 %v1518, %v1858
        %v1867 = vmul.f32 %v1859, 1.442695
        %v1868 = vpow.pop %v1867
        %v1869 = vmul.f32 %v1860, 1.442695
        %v1870 = vpow.pop %v1869
        %v1871 = vmul.f32 %v1861, 1.442695
        %v1872 = vpow.pop %v1871
        %v1873 = vmul.f32 %v1862, 1.442695
        %v1874 = vpow.pop %v1873
        %v1875 = vmul.f32 %v1863, 1.442695
        %v1876 = vpow.pop %v1875
        %v1877 = vmul.f32 %v1864, 1.442695
        %v1878 = vpow.pop %v1877
        %v1879 = vmul.f32 %v1865, 1.442695
        %v1880 = vpow.pop %v1879
        %v1881 = vmul.f32 %v1866, 1.442695
        %v1882 = vpow.pop %v1881
        %v1883 = vsel %vm524, %v1868, 0.0
        %v1884 = vsel %vm524, %v1872, 0.0
        %v1885 = vadd.f32 %v1883, %v1884
        %v1886 = vsel %vm524, %v1876, 0.0
        %v1887 = vadd.f32 %v1885, %v1886
        %v1888 = vsel %vm524, %v1880, 0.0
        %v1889 = vadd.f32 %v1887, %v1888
        %v1890 = vsel %vm524, %v1870, 0.0
        %v1891 = vsel %vm524, %v1874, 0.0
        %v1892 = vadd.f32 %v1890, %v1891
        %v1893 = vsel %vm524, %v1878, 0.0
        %v1894 = vadd.f32 %v1892, %v1893
        %v1895 = vsel %vm524, %v1882, 0.0
        %v1896 = vadd.f32 %v1894, %v1895
        %v1897 = vrcp.pop %v1889
        %v1898 = vrcp.pop %v1896
        %v1899 = vmul.f32 %v1889, %v1897
        %v1900 = vmul.f32 %v1896, %v1898
        %v1901 = vsub.f32 2.0, %v1899
        %v1902 = vsub.f32 2.0, %v1900
        %v1903 = vmul.f32 %v1897, %v1901
        %v1904 = vmul.f32 %v1898, %v1902
        %v1905 = vmul.f32 %v1868, %v1903
        %v1906 = vmul.f32 %v1870, %v1904
        %v1907 = vmul.f32 %v1872, %v1903
        %v1908 = vmul.f32 %v1874, %v1904
        %v1909 = vmul.f32 %v1876, %v1903
        %v1910 = vmul.f32 %v1878, %v1904
        %v1911 = vmul.f32 %v1880, %v1903
        %v1912 = vmul.f32 %v1882, %v1904
        %v1913 = vsel %vm524, %v1594, -inf
        %v1914 = vsel %vm524, %v1675, -inf
        %v1915 = vsel %vm524, %v1756, -inf
        %v1916 = vmax.f32 %v1913, %v1915
        %v1917 = vsel %vm524, %v1837, -inf
        %v1918 = vmax.f32 %v1914, %v1917
        %v1919 = vmax.f32 %v1916, %v1918
        %v1920 = vsel %vm524, %v1599, -inf
        %v1921 = vsel %vm524, %v1680, -inf
        %v1922 = vsel %vm524, %v1761, -inf
        %v1923 = vmax.f32 %v1920, %v1922
        %v1924 = vsel %vm524, %v1842, -inf
        %v1925 = vmax.f32 %v1921, %v1924
        %v1926 = vmax.f32 %v1923, %v1925
        %v1927 = vsub.f32 %v1594, %v1919
        %v1928 = vsub.f32 %v1599, %v1926
        %v1929 = vsub.f32 %v1675, %v1919
        %v1930 = vsub.f32 %v1680, %v1926
        %v1931 = vsub.f32 %v1756, %v1919
        %v1932 = vsub.f32 %v1761, %v1926
        %v1933 = vsub.f32 %v1837, %v1919
        %v1934 = vsub.f32 %v1842, %v1926
        %v1935 = vmul.f32 %v1927, 1.442695
        %v1936 = vpow.pop %v1935
        %v1937 = vmul.f32 %v1928, 1.442695
        %v1938 = vpow.pop %v1937
        %v1939 = vmul.f32 %v1929, 1.442695
        %v1940 = vpow.pop %v1939
        %v1941 = vmul.f32 %v1930, 1.442695
        %v1942 = vpow.pop %v1941
        %v1943 = vmul.f32 %v1931, 1.442695
        %v1944 = vpow.pop %v1943
        %v1945 = vmul.f32 %v1932, 1.442695
        %v1946 = vpow.pop %v1945
        %v1947 = vmul.f32 %v1933, 1.442695
        %v1948 = vpow.pop %v1947
        %v1949 = vmul.f32 %v1934, 1.442695
        %v1950 = vpow.pop %v1949
        %v1951 = vsel %vm524, %v1936, 0.0
        %v1952 = vsel %vm524, %v1940, 0.0
        %v1953 = vadd.f32 %v1951, %v1952
        %v1954 = vsel %vm524, %v1944, 0.0
        %v1955 = vadd.f32 %v1953, %v1954
        %v1956 = vsel %vm524, %v1948, 0.0
        %v1957 = vadd.f32 %v1955, %v1956
        %v1958 = vsel %vm524, %v1938, 0.0
        %v1959 = vsel %vm524, %v1942, 0.0
        %v1960 = vadd.f32 %v1958, %v1959
        %v1961 = vsel %vm524, %v1946, 0.0
        %v1962 = vadd.f32 %v1960, %v1961
        %v1963 = vsel %vm524, %v1950, 0.0
        %v1964 = vadd.f32 %v1962, %v1963
        %v1965 = vrcp.pop %v1957
        %v1966 = vrcp.pop %v1964
        %v1967 = vmul.f32 %v1957, %v1965
        %v1968 = vmul.f32 %v1964, %v1966
        %v1969 = vsub.f32 2.0, %v1967
        %v1970 = vsub.f32 2.0, %v1968
        %v1971 = vmul.f32 %v1965, %v1969
        %v1972 = vmul.f32 %v1966, %v1970
        %v1973 = vmul.f32 %v1936, %v1971
        %v1974 = vmul.f32 %v1938, %v1972
        %v1975 = vmul.f32 %v1940, %v1971
        %v1976 = vmul.f32 %v1942, %v1972
        %v1977 = vmul.f32 %v1944, %v1971
        %v1978 = vmul.f32 %v1946, %v1972
        %v1979 = vmul.f32 %v1948, %v1971
        %v1980 = vmul.f32 %v1950, %v1972
        %v1981 = vmul.f32 %v1905, %v1973
        %v1982 = vmul.f32 %v1906, %v1974
        %v1983 = vmul.f32 %v1907, %v1975
        %v1984 = vmul.f32 %v1908, %v1976
        %v1985 = vmul.f32 %v1909, %v1977
        %v1986 = vmul.f32 %v1910, %v1978
        %v1987 = vmul.f32 %v1911, %v1979
        %v1988 = vmul.f32 %v1912, %v1980
        %v1989 = vmul.f32 %v388, %v1981
        %v1990 = vmul.f32 %v389, %v1982
        %v1991 = vmul.f32 %v406, %v1983
        %v1992 = vmul.f32 %v407, %v1984
        %v1993 = vmul.f32 %v424, %v1985
        %v1994 = vmul.f32 %v425, %v1986
        %v1995 = vmul.f32 %v442, %v1987
        %v1996 = vmul.f32 %v443, %v1988
        %v1997 = vmul.f32 %v468, %v1981
        %v1998 = vmul.f32 %v469, %v1982
        %v1999 = vmul.f32 %v486, %v1983
        %v2000 = vmul.f32 %v487, %v1984
        %v2001 = vmul.f32 %v504, %v1985
        %v2002 = vmul.f32 %v505, %v1986
        %v2003 = vmul.f32 %v522, %v1987
        %v2004 = vmul.f32 %v523, %v1988
        %v2005 = vmul.f32 %v1989, %v1997
        %v2006 = vmul.f32 %v1990, %v1998
        %v2007 = vmul.f32 %v1991, %v1999
        %v2008 = vmul.f32 %v1992, %v2000
        %v2009 = vmul.f32 %v1993, %v2001
        %v2010 = vmul.f32 %v1994, %v2002
        %v2011 = vmul.f32 %v1995, %v2003
        %v2012 = vmul.f32 %v1996, %v2004
        %2013 = vst.msk [vmem:[%s323] sm:$0xff] %vm524, %v2005
        %2014 = vst.msk [vmem:[%s323 + $0x8] sm:$0xff] %vm524, %v2006
        %2015 = vst.msk [vmem:[%s323 + $0x10] sm:$0xff] %vm524, %v2007
        %2016 = vst.msk [vmem:[%s323 + $0x18] sm:$0xff] %vm524, %v2008
        %2017 = vst.msk [vmem:[%s323 + $0x20] sm:$0xff] %vm524, %v2009
        %2018 = vst.msk [vmem:[%s323 + $0x28] sm:$0xff] %vm524, %v2010
        %2019 = vst.msk [vmem:[%s323 + $0x30] sm:$0xff] %vm524, %v2011
        %2020 = vst.msk [vmem:[%s323 + $0x38] sm:$0xff] %vm524, %v2012
        %s2021 = sand.u32 %s150, 1
        %s2022 = scalar_lea.sflag [#allocation4], %s2021
        %s2023 = sand.u32 %s150, 1
        %s2024 = smul.addr %s2023, 64
        %s2025 = scalar_lea.vmem [#allocation12], %s2024
        // Predicated region
        $region61: #{tpu_custom_call.1} parent=39 // pred_check
          %p2026 = pneg %p160
        $region62: #{tpu_custom_call.1} parent=39 // pred_check_branch
          %2028 = sbr.rel (%p2026) target = $region64
        $region63: #{tpu_custom_call.1} parent=39 // pred_region
          %s2030 = ssub.s32 1024, 1024
          %2031 = vsyncadd %s2022, %s2030
          %s2032 = smul.addr %s27, 8
          %s2033 = smul.addr %s2032, 128
          %s2034 = scalar_lea.hbm %s5, %s2033
          %s2035 = sshll.u32 %s2025, 4
          %s2036 = int_to_ptr.vmem [resolvable:$true] %s2035
          %2041 = dma.vmem_to_hbm [thread:$0]  %s2036, 1024, %s2034, %s2022, 128, 128, 8
        $region64: #{tpu_custom_call.1} parent=39 // pred_fallthru
          _
      $region40: #{tpu_custom_call.1} parent=5 // pred_fallthru
        _
      %p2042 = scmp.le.s32.totalorder 2, %s22
      // Predicated region
      $region65: #{tpu_custom_call.1} parent=5 // pred_check
        %p2043 = pneg %p2042
      $region66: #{tpu_custom_call.1} parent=5 // pred_check_branch
        %2045 = sbr.rel (%p2043) target = $region68
      $region67: #{tpu_custom_call.1} parent=5 // pred_region
        %s2046 = ssub.s32 %s22, 2
        // Predicated region
        $region69: #{tpu_custom_call.1} parent=67 // pred_check
          %p2047 = pneg %p166
        $region70: #{tpu_custom_call.1} parent=67 // pred_check_branch
          %2049 = sbr.rel (%p2047) target = $region72
        $region71: #{tpu_custom_call.1} parent=67 // pred_region
          %s2050 = sand.u32 %s151, 1
          %s2051 = scalar_lea.sflag [#allocation4], %s2050
          %s2052 = sand.u32 %s151, 1
          %s2053 = smul.addr %s2052, 64
          %s2054 = scalar_lea.vmem [#allocation12], %s2053
          %2055 = dma.done %s2051, 1024
        $region72: #{tpu_custom_call.1} parent=67 // pred_fallthru
          _
      $region68: #{tpu_custom_call.1} parent=5 // pred_fallthru
        _
    $region6: #{tpu_custom_call.1} parent=1 // loop_footer
      %s26 = sadd.s32 1, %s22
    $region7: #{tpu_custom_call.1} parent=1 // loop_footer_branch
      %21 = sbr.rel target = $region3
    $region8: #{tpu_custom_call.1} parent=1 // loop_exit
      _
    %2056 = vsyncpa [#allocation3], 1
    %s2057 = scalar_lea.sflag [#allocation3], 1
    %2058 = vsyncpa %s2057, 1
    %2059 = vsyncpa [#allocation7], 1
    %s2060 = scalar_lea.sflag [#allocation7], 1
    %2061 = vsyncpa %s2060, 1
    %2062 = vsyncpa [#allocation4], 1
    %s2063 = scalar_lea.sflag [#allocation4], 1
    %2064 = vsyncpa %s2063, 1
    %2065 = vsyncpa [#allocation5], 1
    %s2066 = scalar_lea.sflag [#allocation5], 1
    %2067 = vsyncpa %s2066, 1
    %2068 = vsyncpa [#allocation10], 1

</llo_original>
